<compile_context>
chip_gen: v5e
topology: v5e:2x2
jax: 0.10.0
libtpu: 0.0.40
codegen_flags: <defaults>
</compile_context>

<pallas_src>
import jax
import jax.numpy as jnp
from jax.experimental import pallas as pl
from jax.experimental.pallas import tpu as pltpu


# ---------------------------------------------------------------------------
# Fused kernel: one grid step == all nL Block layers applied to one batch tile
# ---------------------------------------------------------------------------
def fused_net_kernel(x_ref, xb_ref,            # VMEM (bt, m) batch tiles
                     peltT_ref, peigT_ref,     # VMEM (m, m)  pre-transposed bases
                     eig_ref,                  # VMEM (4, m)  [eig^-2a, eig^2p, eig^2a(head), eig^2a(tail)]
                     scal_ref,                 # SMEM (nL*8,) flattened per-layer scalars
                     w12_ref, b12_ref,         # VMEM (nL, m, 64), (nL, 1, 64)  Pelt+lin2+conv2+pool folded
                     wp2_ref,                  # VMEM (nL, 64, 16)              conv3+pool folded
                     w3_ref,                   # VMEM (nL, 1, 16)               lin3 weight row
                     out_ref):                 # VMEM (bt, m)
    f32 = jnp.float32
    softplus = jax.nn.softplus
    nL = w12_ref.shape[0]

    xb    = xb_ref[...]
    peltT = peltT_ref[...]
    peigT = peigT_ref[...]
    eig   = eig_ref[...]
    eigT   = eig[0:1, :]                       # eig^(-2a)  (diag of T^T T)
    eigD   = eig[1:2, :]                       # eig^(2p)   (diag of D^T D)
    e2a_lo = eig[2:3, :]                       # eig^(2a), first 4m/5 entries, else 0
    e2a_hi = eig[3:4, :]                       # eig^(2a), last  m/5  entries, else 0

    # ---------------- Cnn_reg (depends only on x_b) — hoisted out of the layer loop ----
    q     = scal_ref[2]                        # 2(a+p)/(a+2), identical for all layers
    x_fil = xb * e2a_lo
    diff  = xb * e2a_hi
    delta = jnp.sqrt(jnp.sum(diff * diff,   axis=1, keepdims=True))      # (bt,1)
    rho   = jnp.sqrt(jnp.sum(x_fil * x_fil, axis=1, keepdims=True)) + 1e-20
    ratio = jnp.exp(q * jnp.log(delta / rho))                            # (delta/rho)^q

    def layer_body(k, x):
        base = k * 8
        sp_gamma = scal_ref[base + 0]          # softplus(gamma)
        sp_d     = scal_ref[base + 1]          # softplus(d)
        c3b      = scal_ref[base + 3]          # conv3 bias (pool-invariant)
        b3       = scal_ref[base + 4]          # lin3 bias

        # ---- Cnn_bar: mu = cnn_mu(Pelt(x)); Pelt/lin2/conv2/pool folded into W12 ----
        h  = softplus(jnp.dot(x, w12_ref[k], preferred_element_type=f32) + b12_ref[k])   # (bt,64)
        h  = softplus(jnp.dot(h, wp2_ref[k], preferred_element_type=f32) + c3b)          # (bt,16)
        mu = softplus(jnp.sum(h * w3_ref[k], axis=1, keepdims=True) + b3)                # (bt,1)

        # ---- regularisation + step size ----
        reg   = ratio * sp_d                                             # (bt,1)
        t     = eigT + reg * eigD                                        # (bt,m)
        denom = jnp.max(t, axis=1, keepdims=True)                        # (bt,1)
        gamma = sp_gamma / denom                                         # exact divide

        # ---- gradient step (diag ops) + Pelt:  x - gamma*grad == x*(1-gamma*t)+gamma*xb
        x_tilde = jnp.dot(x * (1.0 - gamma * t) + gamma * xb, peltT,
                          preferred_element_type=f32)                    # element basis

        # ---- cube barrier prox ("cardan"): root of the cubic in (0,1) --------------
        lam = gamma * mu * 1e-6                                          # (bt,1)
        lo = jnp.zeros_like(x_tilde)
        half = 0.5                                                       # compile-time schedule
        for _ in range(24):
            mid = lo + half
            # sign(f(mid)) with f(u)=u-x-lam/u+lam/(1-u) equals sign(g(mid)) on (0,1)
            g = (mid - x_tilde) * (mid * (1.0 - mid)) + lam * (2.0 * mid - 1.0)
            lo = jnp.where(g < 0.0, mid, lo)
            half = half * 0.5
        u = lo + half

        # ---- back to eigen basis ----
        return jnp.dot(u, peigT, preferred_element_type=f32)

    out_ref[...] = jax.lax.fori_loop(0, nL, layer_body, x_ref[...])


# ---------------------------------------------------------------------------
# Wrapper: one pallas_call for the whole nL-layer network
# ---------------------------------------------------------------------------
def fused_layers(x, xb, consts, stacked):
    n, m = x.shape
    nL = stacked["w12"].shape[0]

    # batch tiling: >=8 sublanes; larger tiles amortize per-grid-step overhead
    if n >= 512:
        bt = 256
    elif n >= 128:
        bt = 128
    else:
        bt = max(8, ((n + 7) // 8) * 8)
    n_pad = ((n + bt - 1) // bt) * bt
    if n_pad != n:
        pad = jnp.zeros((n_pad - n, m), jnp.float32)
        x = jnp.concatenate([x, pad], axis=0)
        xb = jnp.concatenate([xb, pad], axis=0)
    grid_b = n_pad // bt

    bmap = lambda b: (b, 0)            # batch-tiled arrays
    cmap2 = lambda b: (0, 0)           # constants, VMEM-resident across the grid
    cmap3 = lambda b: (0, 0, 0)        # resident stacked per-layer weights

    out = pl.pallas_call(
        fused_net_kernel,
        out_shape=jax.ShapeDtypeStruct((n_pad, m), jnp.float32),
        grid=(grid_b,),
        in_specs=[
            pl.BlockSpec((bt, m), bmap),                        # x
            pl.BlockSpec((bt, m), bmap),                        # x_b
            pl.BlockSpec((m, m), cmap2),                        # Pelt^T
            pl.BlockSpec((m, m), cmap2),                        # Peig^T
            pl.BlockSpec((4, m), cmap2),                        # eig pack
            pl.BlockSpec(memory_space=pltpu.MemorySpace.SMEM),  # scal (nL*8,)
            pl.BlockSpec((nL, m, 64), cmap3),                   # W12 (folded)
            pl.BlockSpec((nL, 1, 64), cmap3),                   # b12 (folded)
            pl.BlockSpec((nL, 64, 16), cmap3),                  # conv3+pool folded
            pl.BlockSpec((nL, 1, 16), cmap3),                   # lin3 weight row
        ],
        out_specs=pl.BlockSpec((bt, m), bmap),
        compiler_params=pltpu.CompilerParams(
            dimension_semantics=("parallel",)),
    )(x, xb, consts["peltT"], consts["peigT"], consts["eig_pack"],
      stacked["scal_flat"], stacked["w12"], stacked["b12"],
      stacked["wp2"], stacked["w3"])
    return out[:n]


@jax.jit
def my_model_forward(x3, xb3, consts, stacked):
    # NCL (n, 1, nx) in / out; channel squeezed for the kernel.
    x = x3[:, 0, :]
    xb = xb3[:, 0, :]
    out = fused_layers(x, xb, consts, stacked)
    return out[:, None, :]


# ---------------------------------------------------------------------------
# Deterministic synthetic parameter / operator construction (host glue)
# ---------------------------------------------------------------------------
def avgpool_matrix(L, k):
    idx = jnp.arange(L)
    return jnp.zeros((L, L // k), jnp.float32).at[idx, idx // k].set(1.0 / k)


def conv5_matrix(L, w5):
    # torch Conv1d(1,1,5,padding=2) as y = h @ M (cross-correlation, zero pad):
    # y[i] = sum_t w5[t] * h[i+t-2]  ->  M[j, i] = w5[j - i + 2] for |j - i| <= 2.
    jrow = jnp.arange(L)[:, None]
    icol = jnp.arange(L)[None, :]
    t = jrow - icol + 2
    valid = (t >= 0) & (t <= 4)
    return jnp.where(valid, w5[jnp.clip(t, 0, 4)], 0.0).astype(jnp.float32)


def init_exp(m, key, a=1.0, p_ord=1.0):
    eigm = 0.5 + jnp.arange(m, dtype=jnp.float32) / m        # positive "eigenvalues"
    A = jax.random.normal(key, (m, m), dtype=jnp.float32)
    Q, _ = jnp.linalg.qr(A)                                  # orthogonal eigenbasis
    pelt = Q.astype(jnp.float32)                             # eigen -> element
    peig = Q.T.astype(jnp.float32)                           # element -> eigen
    eigT = eigm ** (-2.0 * a)
    eigD = eigm ** (2.0 * p_ord)
    eig2a = eigm ** (2.0 * a)
    nflt = (4 * m) // 5
    lo_mask = jnp.arange(m) < nflt
    eig_pack = jnp.stack([eigT, eigD,
                          jnp.where(lo_mask, eig2a, 0.0),
                          jnp.where(lo_mask, 0.0, eig2a)]).astype(jnp.float32)
    return dict(peltT=pelt.T, peigT=peig.T, eig_pack=eig_pack,
                pool1=avgpool_matrix(256, 4), pool2=avgpool_matrix(64, 4),
                q=float(2.0 * (a + p_ord) / (a + 2.0)))


def init_block(key, nx, q, peltT, pool1, pool2):
    ks = jax.random.split(key, 5)
    w2 = jax.random.normal(ks[0], (nx, 256), jnp.float32) / jnp.sqrt(jnp.float32(nx))
    b2 = jax.random.normal(ks[1], (1, 256), jnp.float32) * 0.01
    c2w = jax.random.normal(ks[2], (5,), jnp.float32) * 0.2
    c3w = jax.random.normal(ks[3], (5,), jnp.float32) * 0.2
    w3 = jax.random.normal(ks[4], (1, 16), jnp.float32) * 0.25
    c2b, c3b, b3 = 0.01, 0.01, 0.01
    gamma_param, d_param = 0.0, 0.01                          # torch inits
    host_sp = lambda v: float(jnp.log1p(jnp.exp(jnp.float32(v))))
    scal = jnp.array([host_sp(gamma_param), host_sp(d_param), q,
                      c3b, b3, 0.0, 0.0, 0.0], jnp.float32)   # (8,)
    # Fold Conv1d(5,pad=2) into the following AvgPool(4) matmul (exact: both linear).
    wp1 = (conv5_matrix(256, c2w) @ pool1).astype(jnp.float32)   # (256, 64)
    wp2 = (conv5_matrix(64, c3w) @ pool2).astype(jnp.float32)    # (64, 16)
    # Fold Pelt -> lin2 -> conv2+pool into one (nx, 64) matmul (exact: no nonlinearity
    # between lin2 and conv2 in Cnn_bar). Pool-invariant conv bias folded into b12.
    w12 = (peltT @ w2 @ wp1).astype(jnp.float32)                 # (nx, 64)
    b12 = (b2 @ wp1 + c2b).astype(jnp.float32)                   # (1, 64)
    return dict(scal=scal, w12=w12, b12=b12, wp2=wp2, w3=w3.astype(jnp.float32))


# ---------------------------------------------------------------------------
if __name__ == "__main__":
    key = jax.random.PRNGKey(0)
    n, nx = 4, 32              # batch, signal length (m == nx)
    nL = 20                    # module-default layer count (all fused into one call)

    k_exp, k_x, k_xb, k_layers = jax.random.split(key, 4)
    exp = init_exp(nx, k_exp)
    consts = dict(peltT=exp["peltT"], peigT=exp["peigT"], eig_pack=exp["eig_pack"])
    blocks = [init_block(k, nx, exp["q"], exp["peltT"], exp["pool1"], exp["pool2"])
              for k in jax.random.split(k_layers, nL)]
    stacked = {name: jnp.stack([b[name] for b in blocks])
               for name in ("w12", "b12", "wp2", "w3")}
    stacked["scal_flat"] = jnp.stack([b["scal"] for b in blocks]).reshape(-1)

    x = jax.random.normal(k_x, (n, 1, nx), dtype=jnp.float32)
    x_b = jax.random.normal(k_xb, (n, 1, nx), dtype=jnp.float32)

    out = my_model_forward(x, x_b, consts, stacked)
    jax.block_until_ready(out)
    assert out.shape == (n, 1, nx) and bool(jnp.all(jnp.isfinite(out)))
    print("KERNEL_OK")
</pallas_src>

<mosaic_0001>
module attributes {stable_mosaic.version = 11 : i64} {
  func.func @fused_net_kernel(%arg0: i32, %arg1: memref<8x32xf32, #tpu.memory_space<vmem>>, %arg2: memref<8x32xf32, #tpu.memory_space<vmem>>, %arg3: memref<32x32xf32, #tpu.memory_space<vmem>>, %arg4: memref<32x32xf32, #tpu.memory_space<vmem>>, %arg5: memref<4x32xf32, #tpu.memory_space<vmem>>, %arg6: memref<160xf32, #tpu.memory_space<smem>>, %arg7: memref<20x32x64xf32, #tpu.memory_space<vmem>>, %arg8: memref<20x1x64xf32, #tpu.memory_space<vmem>>, %arg9: memref<20x64x16xf32, #tpu.memory_space<vmem>>, %arg10: memref<20x1x16xf32, #tpu.memory_space<vmem>>, %arg11: memref<8x32xf32, #tpu.memory_space<vmem>>) attributes {dimension_semantics = [#tpu.dimension_semantics<parallel>], iteration_bounds = array<i64: 1>, scalar_prefetch = 0 : i64, scratch_operands = 0 : i64, tpu.core_type = #tpu.core_type<tc>, window_params = [{transform_indices = @transform_0, window_bounds = array<i64: 8, 32>}, {transform_indices = @transform_1, window_bounds = array<i64: 8, 32>}, {pipeline_mode = #tpu.pipeline_mode<synchronous>, transform_indices = @transform_2, window_bounds = array<i64: 32, 32>}, {pipeline_mode = #tpu.pipeline_mode<synchronous>, transform_indices = @transform_3, window_bounds = array<i64: 32, 32>}, {pipeline_mode = #tpu.pipeline_mode<synchronous>, transform_indices = @transform_4, window_bounds = array<i64: 4, 32>}, {transform_indices = @transform_5, window_bounds = array<i64: 160>}, {pipeline_mode = #tpu.pipeline_mode<synchronous>, transform_indices = @transform_6, window_bounds = array<i64: 20, 32, 64>}, {pipeline_mode = #tpu.pipeline_mode<synchronous>, transform_indices = @transform_7, window_bounds = array<i64: 20, 1, 64>}, {pipeline_mode = #tpu.pipeline_mode<synchronous>, transform_indices = @transform_8, window_bounds = array<i64: 20, 64, 16>}, {pipeline_mode = #tpu.pipeline_mode<synchronous>, transform_indices = @transform_9, window_bounds = array<i64: 20, 1, 16>}, {transform_indices = @transform_10, window_bounds = array<i64: 8, 32>}]} {
    %c0 = arith.constant 0 : index
    %c0_0 = arith.constant 0 : index
    %0 = vector.load %arg2[%c0, %c0_0] : memref<8x32xf32, #tpu.memory_space<vmem>>, vector<8x32xf32>
    %c0_1 = arith.constant 0 : index
    %c0_2 = arith.constant 0 : index
    %1 = vector.load %arg3[%c0_1, %c0_2] : memref<32x32xf32, #tpu.memory_space<vmem>>, vector<32x32xf32>
    %c0_3 = arith.constant 0 : index
    %c0_4 = arith.constant 0 : index
    %2 = vector.load %arg4[%c0_3, %c0_4] : memref<32x32xf32, #tpu.memory_space<vmem>>, vector<32x32xf32>
    %c0_5 = arith.constant 0 : index
    %c0_6 = arith.constant 0 : index
    %3 = vector.load %arg5[%c0_5, %c0_6] : memref<4x32xf32, #tpu.memory_space<vmem>>, vector<4x32xf32>
    %4 = vector.extract_strided_slice %3 {offsets = [0, 0], sizes = [1, 32], strides = [1, 1]} : vector<4x32xf32> to vector<1x32xf32>
    %5 = vector.extract_strided_slice %3 {offsets = [1, 0], sizes = [1, 32], strides = [1, 1]} : vector<4x32xf32> to vector<1x32xf32>
    %6 = vector.extract_strided_slice %3 {offsets = [2, 0], sizes = [1, 32], strides = [1, 1]} : vector<4x32xf32> to vector<1x32xf32>
    %7 = vector.extract_strided_slice %3 {offsets = [3, 0], sizes = [1, 32], strides = [1, 1]} : vector<4x32xf32> to vector<1x32xf32>
    %c2 = arith.constant 2 : index
    %8 = memref.load %arg6[%c2] : memref<160xf32, #tpu.memory_space<smem>>
    %9 = vector.broadcast %6 : vector<1x32xf32> to vector<8x32xf32>
    %10 = arith.mulf %0, %9 : vector<8x32xf32>
    %11 = vector.broadcast %7 : vector<1x32xf32> to vector<8x32xf32>
    %12 = arith.mulf %0, %11 : vector<8x32xf32>
    %13 = arith.mulf %12, %12 : vector<8x32xf32>
    %cst = arith.constant dense<0.000000e+00> : vector<8xf32>
    %14 = vector.multi_reduction <add>, %13, %cst [1] : vector<8x32xf32> to vector<8xf32>
    %15 = vector.shape_cast %14 : vector<8xf32> to vector<8x1xf32>
    %16 = math.sqrt %15 : vector<8x1xf32>
    %17 = arith.mulf %10, %10 : vector<8x32xf32>
    %cst_7 = arith.constant dense<0.000000e+00> : vector<8xf32>
    %18 = vector.multi_reduction <add>, %17, %cst_7 [1] : vector<8x32xf32> to vector<8xf32>
    %19 = vector.shape_cast %18 : vector<8xf32> to vector<8x1xf32>
    %20 = math.sqrt %19 : vector<8x1xf32>
    %cst_8 = arith.constant 9.99999968E-21 : f32
    %21 = vector.broadcast %cst_8 : f32 to vector<8x1xf32>
    %22 = arith.addf %20, %21 : vector<8x1xf32>
    %23 = arith.divf %16, %22 : vector<8x1xf32>
    %24 = math.log %23 : vector<8x1xf32>
    %25 = vector.broadcast %8 : f32 to vector<8x1xf32>
    %26 = arith.mulf %25, %24 : vector<8x1xf32>
    %27 = math.exp %26 : vector<8x1xf32>
    %c0_9 = arith.constant 0 : index
    %c0_10 = arith.constant 0 : index
    %28 = vector.load %arg1[%c0_9, %c0_10] : memref<8x32xf32, #tpu.memory_space<vmem>>, vector<8x32xf32>
    %c0_i32 = arith.constant 0 : i32
    %c20_i32 = arith.constant 20 : i32
    %29 = arith.addi %c0_i32, %c20_i32 : i32
    %c1_i32 = arith.constant 1 : i32
    %30 = scf.for %arg12 = %c0_i32 to %29 step %c1_i32 iter_args(%arg13 = %28) -> (vector<8x32xf32>)  : i32 {
      %c8_i32 = arith.constant 8 : i32
      %32 = arith.muli %arg12, %c8_i32 : i32
      %c0_i32_14 = arith.constant 0 : i32
      %33 = arith.addi %32, %c0_i32_14 : i32
      %34 = arith.index_cast %33 : i32 to index
      %35 = memref.load %arg6[%34] : memref<160xf32, #tpu.memory_space<smem>>
      %c1_i32_15 = arith.constant 1 : i32
      %36 = arith.addi %32, %c1_i32_15 : i32
      %37 = arith.index_cast %36 : i32 to index
      %38 = memref.load %arg6[%37] : memref<160xf32, #tpu.memory_space<smem>>
      %c3_i32 = arith.constant 3 : i32
      %39 = arith.addi %32, %c3_i32 : i32
      %40 = arith.index_cast %39 : i32 to index
      %41 = memref.load %arg6[%40] : memref<160xf32, #tpu.memory_space<smem>>
      %c4_i32 = arith.constant 4 : i32
      %42 = arith.addi %32, %c4_i32 : i32
      %43 = arith.index_cast %42 : i32 to index
      %44 = memref.load %arg6[%43] : memref<160xf32, #tpu.memory_space<smem>>
      %45 = arith.index_cast %arg12 : i32 to index
      %c0_16 = arith.constant 0 : index
      %c0_17 = arith.constant 0 : index
      %46 = vector.load %arg7[%45, %c0_16, %c0_17] : memref<20x32x64xf32, #tpu.memory_space<vmem>>, vector<1x32x64xf32>
      %47 = vector.shape_cast %46 : vector<1x32x64xf32> to vector<32x64xf32>
      %cst_18 = arith.constant dense<0.000000e+00> : vector<8x64xf32>
      %48 = tpu.matmul %arg13, %47, %cst_18 {dimension_numbers = #tpu.dot_dimension_numbers<[1], [0], [0], [1], [0, 0, 1, 1], [], []>} : vector<8x32xf32>, vector<32x64xf32>, vector<8x64xf32> -> vector<8x64xf32>
      %49 = arith.index_cast %arg12 : i32 to index
      %c0_19 = arith.constant 0 : index
      %c0_20 = arith.constant 0 : index
      %50 = vector.load %arg8[%49, %c0_19, %c0_20] : memref<20x1x64xf32, #tpu.memory_space<vmem>>, vector<1x1x64xf32>
      %51 = vector.shape_cast %50 : vector<1x1x64xf32> to vector<1x64xf32>
      %52 = vector.broadcast %51 : vector<1x64xf32> to vector<8x64xf32>
      %53 = arith.addf %48, %52 : vector<8x64xf32>
      %cst_21 = arith.constant 0.000000e+00 : f32
      %54 = vector.broadcast %cst_21 : f32 to vector<8x64xf32>
      %55 = arith.maximumf %53, %54 : vector<8x64xf32>
      %56 = vector.broadcast %cst_21 : f32 to vector<8x64xf32>
      %57 = arith.subf %53, %56 : vector<8x64xf32>
      %58 = arith.cmpf one, %57, %57 : vector<8x64xf32>
      %59 = vector.broadcast %cst_21 : f32 to vector<8x64xf32>
      %60 = arith.addf %53, %59 : vector<8x64xf32>
      %61 = math.absf %57 : vector<8x64xf32>
      %cst_22 = arith.constant 0.000000e+00 : f32
      %62 = vector.broadcast %cst_22 : f32 to vector<8x64xf32>
      %63 = arith.subf %62, %61 : vector<8x64xf32>
      %64 = math.exp %63 : vector<8x64xf32>
      %65 = math.log1p %64 : vector<8x64xf32>
      %66 = arith.addf %55, %65 : vector<8x64xf32>
      %67 = arith.select %58, %60, %66 : vector<8x64xi1>, vector<8x64xf32>
      %68 = arith.index_cast %arg12 : i32 to index
      %c0_23 = arith.constant 0 : index
      %c0_24 = arith.constant 0 : index
      %69 = vector.load %arg9[%68, %c0_23, %c0_24] : memref<20x64x16xf32, #tpu.memory_space<vmem>>, vector<1x64x16xf32>
      %70 = vector.shape_cast %69 : vector<1x64x16xf32> to vector<64x16xf32>
      %cst_25 = arith.constant dense<0.000000e+00> : vector<8x16xf32>
      %71 = tpu.matmul %67, %70, %cst_25 {dimension_numbers = #tpu.dot_dimension_numbers<[1], [0], [0], [1], [0, 0, 1, 1], [], []>} : vector<8x64xf32>, vector<64x16xf32>, vector<8x16xf32> -> vector<8x16xf32>
      %72 = vector.broadcast %41 : f32 to vector<8x16xf32>
      %73 = arith.addf %71, %72 : vector<8x16xf32>
      %cst_26 = arith.constant 0.000000e+00 : f32
      %74 = vector.broadcast %cst_26 : f32 to vector<8x16xf32>
      %75 = arith.maximumf %73, %74 : vector<8x16xf32>
      %76 = vector.broadcast %cst_26 : f32 to vector<8x16xf32>
      %77 = arith.subf %73, %76 : vector<8x16xf32>
      %78 = arith.cmpf one, %77, %77 : vector<8x16xf32>
      %79 = vector.broadcast %cst_26 : f32 to vector<8x16xf32>
      %80 = arith.addf %73, %79 : vector<8x16xf32>
      %81 = math.absf %77 : vector<8x16xf32>
      %cst_27 = arith.constant 0.000000e+00 : f32
      %82 = vector.broadcast %cst_27 : f32 to vector<8x16xf32>
      %83 = arith.subf %82, %81 : vector<8x16xf32>
      %84 = math.exp %83 : vector<8x16xf32>
      %85 = math.log1p %84 : vector<8x16xf32>
      %86 = arith.addf %75, %85 : vector<8x16xf32>
      %87 = arith.select %78, %80, %86 : vector<8x16xi1>, vector<8x16xf32>
      %88 = arith.index_cast %arg12 : i32 to index
      %c0_28 = arith.constant 0 : index
      %c0_29 = arith.constant 0 : index
      %89 = vector.load %arg10[%88, %c0_28, %c0_29] : memref<20x1x16xf32, #tpu.memory_space<vmem>>, vector<1x1x16xf32>
      %90 = vector.shape_cast %89 : vector<1x1x16xf32> to vector<1x16xf32>
      %91 = vector.broadcast %90 : vector<1x16xf32> to vector<8x16xf32>
      %92 = arith.mulf %87, %91 : vector<8x16xf32>
      %cst_30 = arith.constant dense<0.000000e+00> : vector<8xf32>
      %93 = vector.multi_reduction <add>, %92, %cst_30 [1] : vector<8x16xf32> to vector<8xf32>
      %94 = vector.shape_cast %93 : vector<8xf32> to vector<8x1xf32>
      %95 = vector.broadcast %44 : f32 to vector<8x1xf32>
      %96 = arith.addf %94, %95 : vector<8x1xf32>
      %cst_31 = arith.constant 0.000000e+00 : f32
      %97 = vector.broadcast %cst_31 : f32 to vector<8x1xf32>
      %98 = arith.maximumf %96, %97 : vector<8x1xf32>
      %99 = vector.broadcast %cst_31 : f32 to vector<8x1xf32>
      %100 = arith.subf %96, %99 : vector<8x1xf32>
      %101 = arith.cmpf one, %100, %100 : vector<8x1xf32>
      %102 = vector.broadcast %cst_31 : f32 to vector<8x1xf32>
      %103 = arith.addf %96, %102 : vector<8x1xf32>
      %104 = math.absf %100 : vector<8x1xf32>
      %cst_32 = arith.constant 0.000000e+00 : f32
      %105 = vector.broadcast %cst_32 : f32 to vector<8x1xf32>
      %106 = arith.subf %105, %104 : vector<8x1xf32>
      %107 = math.exp %106 : vector<8x1xf32>
      %108 = math.log1p %107 : vector<8x1xf32>
      %109 = arith.addf %98, %108 : vector<8x1xf32>
      %110 = arith.select %101, %103, %109 : vector<8x1xi1>, vector<8x1xf32>
      %111 = vector.broadcast %38 : f32 to vector<8x1xf32>
      %112 = arith.mulf %27, %111 : vector<8x1xf32>
      %113 = vector.broadcast %112 : vector<8x1xf32> to vector<8x32xf32>
      %114 = vector.broadcast %5 : vector<1x32xf32> to vector<8x32xf32>
      %115 = arith.mulf %113, %114 : vector<8x32xf32>
      %116 = vector.broadcast %4 : vector<1x32xf32> to vector<8x32xf32>
      %117 = arith.addf %116, %115 : vector<8x32xf32>
      %cst_33 = arith.constant dense<0xFF800000> : vector<8xf32>
      %118 = vector.multi_reduction <maximumf>, %117, %cst_33 [1] : vector<8x32xf32> to vector<8xf32>
      %119 = vector.shape_cast %118 : vector<8xf32> to vector<8x1xf32>
      %120 = vector.broadcast %35 : f32 to vector<8x1xf32>
      %121 = arith.divf %120, %119 : vector<8x1xf32>
      %122 = vector.broadcast %121 : vector<8x1xf32> to vector<8x32xf32>
      %123 = arith.mulf %122, %117 : vector<8x32xf32>
      %cst_34 = arith.constant 1.000000e+00 : f32
      %124 = vector.broadcast %cst_34 : f32 to vector<8x32xf32>
      %125 = arith.subf %124, %123 : vector<8x32xf32>
      %126 = arith.mulf %arg13, %125 : vector<8x32xf32>
      %127 = vector.broadcast %121 : vector<8x1xf32> to vector<8x32xf32>
      %128 = arith.mulf %127, %0 : vector<8x32xf32>
      %129 = arith.addf %126, %128 : vector<8x32xf32>
      %cst_35 = arith.constant dense<0.000000e+00> : vector<8x32xf32>
      %130 = tpu.matmul %129, %1, %cst_35 {dimension_numbers = #tpu.dot_dimension_numbers<[1], [0], [0], [1], [0, 0, 1, 1], [], []>} : vector<8x32xf32>, vector<32x32xf32>, vector<8x32xf32> -> vector<8x32xf32>
      %131 = arith.mulf %121, %110 : vector<8x1xf32>
      %cst_36 = arith.constant 9.99999997E-7 : f32
      %132 = vector.broadcast %cst_36 : f32 to vector<8x1xf32>
      %133 = arith.mulf %131, %132 : vector<8x1xf32>
      %cst_37 = arith.constant 0.000000e+00 : f32
      %134 = vector.broadcast %cst_37 : f32 to vector<8x32xf32>
      %cst_38 = arith.constant 5.000000e-01 : f32
      %135 = vector.broadcast %cst_38 : f32 to vector<8x32xf32>
      %136 = arith.addf %134, %135 : vector<8x32xf32>
      %137 = arith.subf %136, %130 : vector<8x32xf32>
      %cst_39 = arith.constant 1.000000e+00 : f32
      %138 = vector.broadcast %cst_39 : f32 to vector<8x32xf32>
      %139 = arith.subf %138, %136 : vector<8x32xf32>
      %140 = arith.mulf %136, %139 : vector<8x32xf32>
      %141 = arith.mulf %137, %140 : vector<8x32xf32>
      %cst_40 = arith.constant 2.000000e+00 : f32
      %142 = vector.broadcast %cst_40 : f32 to vector<8x32xf32>
      %143 = arith.mulf %142, %136 : vector<8x32xf32>
      %cst_41 = arith.constant 1.000000e+00 : f32
      %144 = vector.broadcast %cst_41 : f32 to vector<8x32xf32>
      %145 = arith.subf %143, %144 : vector<8x32xf32>
      %146 = vector.broadcast %133 : vector<8x1xf32> to vector<8x32xf32>
      %147 = arith.mulf %146, %145 : vector<8x32xf32>
      %148 = arith.addf %141, %147 : vector<8x32xf32>
      %cst_42 = arith.constant 0.000000e+00 : f32
      %149 = vector.broadcast %cst_42 : f32 to vector<8x32xf32>
      %150 = arith.cmpf olt, %148, %149 : vector<8x32xf32>
      %151 = arith.select %150, %136, %134 : vector<8x32xi1>, vector<8x32xf32>
      %cst_43 = arith.constant 2.500000e-01 : f32
      %152 = vector.broadcast %cst_43 : f32 to vector<8x32xf32>
      %153 = arith.addf %151, %152 : vector<8x32xf32>
      %154 = arith.subf %153, %130 : vector<8x32xf32>
      %cst_44 = arith.constant 1.000000e+00 : f32
      %155 = vector.broadcast %cst_44 : f32 to vector<8x32xf32>
      %156 = arith.subf %155, %153 : vector<8x32xf32>
      %157 = arith.mulf %153, %156 : vector<8x32xf32>
      %158 = arith.mulf %154, %157 : vector<8x32xf32>
      %cst_45 = arith.constant 2.000000e+00 : f32
      %159 = vector.broadcast %cst_45 : f32 to vector<8x32xf32>
      %160 = arith.mulf %159, %153 : vector<8x32xf32>
      %cst_46 = arith.constant 1.000000e+00 : f32
      %161 = vector.broadcast %cst_46 : f32 to vector<8x32xf32>
      %162 = arith.subf %160, %161 : vector<8x32xf32>
      %163 = vector.broadcast %133 : vector<8x1xf32> to vector<8x32xf32>
      %164 = arith.mulf %163, %162 : vector<8x32xf32>
      %165 = arith.addf %158, %164 : vector<8x32xf32>
      %cst_47 = arith.constant 0.000000e+00 : f32
      %166 = vector.broadcast %cst_47 : f32 to vector<8x32xf32>
      %167 = arith.cmpf olt, %165, %166 : vector<8x32xf32>
      %168 = arith.select %167, %153, %151 : vector<8x32xi1>, vector<8x32xf32>
      %cst_48 = arith.constant 1.250000e-01 : f32
      %169 = vector.broadcast %cst_48 : f32 to vector<8x32xf32>
      %170 = arith.addf %168, %169 : vector<8x32xf32>
      %171 = arith.subf %170, %130 : vector<8x32xf32>
      %cst_49 = arith.constant 1.000000e+00 : f32
      %172 = vector.broadcast %cst_49 : f32 to vector<8x32xf32>
      %173 = arith.subf %172, %170 : vector<8x32xf32>
      %174 = arith.mulf %170, %173 : vector<8x32xf32>
      %175 = arith.mulf %171, %174 : vector<8x32xf32>
      %cst_50 = arith.constant 2.000000e+00 : f32
      %176 = vector.broadcast %cst_50 : f32 to vector<8x32xf32>
      %177 = arith.mulf %176, %170 : vector<8x32xf32>
      %cst_51 = arith.constant 1.000000e+00 : f32
      %178 = vector.broadcast %cst_51 : f32 to vector<8x32xf32>
      %179 = arith.subf %177, %178 : vector<8x32xf32>
      %180 = vector.broadcast %133 : vector<8x1xf32> to vector<8x32xf32>
      %181 = arith.mulf %180, %179 : vector<8x32xf32>
      %182 = arith.addf %175, %181 : vector<8x32xf32>
      %cst_52 = arith.constant 0.000000e+00 : f32
      %183 = vector.broadcast %cst_52 : f32 to vector<8x32xf32>
      %184 = arith.cmpf olt, %182, %183 : vector<8x32xf32>
      %185 = arith.select %184, %170, %168 : vector<8x32xi1>, vector<8x32xf32>
      %cst_53 = arith.constant 6.250000e-02 : f32
      %186 = vector.broadcast %cst_53 : f32 to vector<8x32xf32>
      %187 = arith.addf %185, %186 : vector<8x32xf32>
      %188 = arith.subf %187, %130 : vector<8x32xf32>
      %cst_54 = arith.constant 1.000000e+00 : f32
      %189 = vector.broadcast %cst_54 : f32 to vector<8x32xf32>
      %190 = arith.subf %189, %187 : vector<8x32xf32>
      %191 = arith.mulf %187, %190 : vector<8x32xf32>
      %192 = arith.mulf %188, %191 : vector<8x32xf32>
      %cst_55 = arith.constant 2.000000e+00 : f32
      %193 = vector.broadcast %cst_55 : f32 to vector<8x32xf32>
      %194 = arith.mulf %193, %187 : vector<8x32xf32>
      %cst_56 = arith.constant 1.000000e+00 : f32
      %195 = vector.broadcast %cst_56 : f32 to vector<8x32xf32>
      %196 = arith.subf %194, %195 : vector<8x32xf32>
      %197 = vector.broadcast %133 : vector<8x1xf32> to vector<8x32xf32>
      %198 = arith.mulf %197, %196 : vector<8x32xf32>
      %199 = arith.addf %192, %198 : vector<8x32xf32>
      %cst_57 = arith.constant 0.000000e+00 : f32
      %200 = vector.broadcast %cst_57 : f32 to vector<8x32xf32>
      %201 = arith.cmpf olt, %199, %200 : vector<8x32xf32>
      %202 = arith.select %201, %187, %185 : vector<8x32xi1>, vector<8x32xf32>
      %cst_58 = arith.constant 3.125000e-02 : f32
      %203 = vector.broadcast %cst_58 : f32 to vector<8x32xf32>
      %204 = arith.addf %202, %203 : vector<8x32xf32>
      %205 = arith.subf %204, %130 : vector<8x32xf32>
      %cst_59 = arith.constant 1.000000e+00 : f32
      %206 = vector.broadcast %cst_59 : f32 to vector<8x32xf32>
      %207 = arith.subf %206, %204 : vector<8x32xf32>
      %208 = arith.mulf %204, %207 : vector<8x32xf32>
      %209 = arith.mulf %205, %208 : vector<8x32xf32>
      %cst_60 = arith.constant 2.000000e+00 : f32
      %210 = vector.broadcast %cst_60 : f32 to vector<8x32xf32>
      %211 = arith.mulf %210, %204 : vector<8x32xf32>
      %cst_61 = arith.constant 1.000000e+00 : f32
      %212 = vector.broadcast %cst_61 : f32 to vector<8x32xf32>
      %213 = arith.subf %211, %212 : vector<8x32xf32>
      %214 = vector.broadcast %133 : vector<8x1xf32> to vector<8x32xf32>
      %215 = arith.mulf %214, %213 : vector<8x32xf32>
      %216 = arith.addf %209, %215 : vector<8x32xf32>
      %cst_62 = arith.constant 0.000000e+00 : f32
      %217 = vector.broadcast %cst_62 : f32 to vector<8x32xf32>
      %218 = arith.cmpf olt, %216, %217 : vector<8x32xf32>
      %219 = arith.select %218, %204, %202 : vector<8x32xi1>, vector<8x32xf32>
      %cst_63 = arith.constant 1.562500e-02 : f32
      %220 = vector.broadcast %cst_63 : f32 to vector<8x32xf32>
      %221 = arith.addf %219, %220 : vector<8x32xf32>
      %222 = arith.subf %221, %130 : vector<8x32xf32>
      %cst_64 = arith.constant 1.000000e+00 : f32
      %223 = vector.broadcast %cst_64 : f32 to vector<8x32xf32>
      %224 = arith.subf %223, %221 : vector<8x32xf32>
      %225 = arith.mulf %221, %224 : vector<8x32xf32>
      %226 = arith.mulf %222, %225 : vector<8x32xf32>
      %cst_65 = arith.constant 2.000000e+00 : f32
      %227 = vector.broadcast %cst_65 : f32 to vector<8x32xf32>
      %228 = arith.mulf %227, %221 : vector<8x32xf32>
      %cst_66 = arith.constant 1.000000e+00 : f32
      %229 = vector.broadcast %cst_66 : f32 to vector<8x32xf32>
      %230 = arith.subf %228, %229 : vector<8x32xf32>
      %231 = vector.broadcast %133 : vector<8x1xf32> to vector<8x32xf32>
      %232 = arith.mulf %231, %230 : vector<8x32xf32>
      %233 = arith.addf %226, %232 : vector<8x32xf32>
      %cst_67 = arith.constant 0.000000e+00 : f32
      %234 = vector.broadcast %cst_67 : f32 to vector<8x32xf32>
      %235 = arith.cmpf olt, %233, %234 : vector<8x32xf32>
      %236 = arith.select %235, %221, %219 : vector<8x32xi1>, vector<8x32xf32>
      %cst_68 = arith.constant 7.812500e-03 : f32
      %237 = vector.broadcast %cst_68 : f32 to vector<8x32xf32>
      %238 = arith.addf %236, %237 : vector<8x32xf32>
      %239 = arith.subf %238, %130 : vector<8x32xf32>
      %cst_69 = arith.constant 1.000000e+00 : f32
      %240 = vector.broadcast %cst_69 : f32 to vector<8x32xf32>
      %241 = arith.subf %240, %238 : vector<8x32xf32>
      %242 = arith.mulf %238, %241 : vector<8x32xf32>
      %243 = arith.mulf %239, %242 : vector<8x32xf32>
      %cst_70 = arith.constant 2.000000e+00 : f32
      %244 = vector.broadcast %cst_70 : f32 to vector<8x32xf32>
      %245 = arith.mulf %244, %238 : vector<8x32xf32>
      %cst_71 = arith.constant 1.000000e+00 : f32
      %246 = vector.broadcast %cst_71 : f32 to vector<8x32xf32>
      %247 = arith.subf %245, %246 : vector<8x32xf32>
      %248 = vector.broadcast %133 : vector<8x1xf32> to vector<8x32xf32>
      %249 = arith.mulf %248, %247 : vector<8x32xf32>
      %250 = arith.addf %243, %249 : vector<8x32xf32>
      %cst_72 = arith.constant 0.000000e+00 : f32
      %251 = vector.broadcast %cst_72 : f32 to vector<8x32xf32>
      %252 = arith.cmpf olt, %250, %251 : vector<8x32xf32>
      %253 = arith.select %252, %238, %236 : vector<8x32xi1>, vector<8x32xf32>
      %cst_73 = arith.constant 3.906250e-03 : f32
      %254 = vector.broadcast %cst_73 : f32 to vector<8x32xf32>
      %255 = arith.addf %253, %254 : vector<8x32xf32>
      %256 = arith.subf %255, %130 : vector<8x32xf32>
      %cst_74 = arith.constant 1.000000e+00 : f32
      %257 = vector.broadcast %cst_74 : f32 to vector<8x32xf32>
      %258 = arith.subf %257, %255 : vector<8x32xf32>
      %259 = arith.mulf %255, %258 : vector<8x32xf32>
      %260 = arith.mulf %256, %259 : vector<8x32xf32>
      %cst_75 = arith.constant 2.000000e+00 : f32
      %261 = vector.broadcast %cst_75 : f32 to vector<8x32xf32>
      %262 = arith.mulf %261, %255 : vector<8x32xf32>
      %cst_76 = arith.constant 1.000000e+00 : f32
      %263 = vector.broadcast %cst_76 : f32 to vector<8x32xf32>
      %264 = arith.subf %262, %263 : vector<8x32xf32>
      %265 = vector.broadcast %133 : vector<8x1xf32> to vector<8x32xf32>
      %266 = arith.mulf %265, %264 : vector<8x32xf32>
      %267 = arith.addf %260, %266 : vector<8x32xf32>
      %cst_77 = arith.constant 0.000000e+00 : f32
      %268 = vector.broadcast %cst_77 : f32 to vector<8x32xf32>
      %269 = arith.cmpf olt, %267, %268 : vector<8x32xf32>
      %270 = arith.select %269, %255, %253 : vector<8x32xi1>, vector<8x32xf32>
      %cst_78 = arith.constant 0.001953125 : f32
      %271 = vector.broadcast %cst_78 : f32 to vector<8x32xf32>
      %272 = arith.addf %270, %271 : vector<8x32xf32>
      %273 = arith.subf %272, %130 : vector<8x32xf32>
      %cst_79 = arith.constant 1.000000e+00 : f32
      %274 = vector.broadcast %cst_79 : f32 to vector<8x32xf32>
      %275 = arith.subf %274, %272 : vector<8x32xf32>
      %276 = arith.mulf %272, %275 : vector<8x32xf32>
      %277 = arith.mulf %273, %276 : vector<8x32xf32>
      %cst_80 = arith.constant 2.000000e+00 : f32
      %278 = vector.broadcast %cst_80 : f32 to vector<8x32xf32>
      %279 = arith.mulf %278, %272 : vector<8x32xf32>
      %cst_81 = arith.constant 1.000000e+00 : f32
      %280 = vector.broadcast %cst_81 : f32 to vector<8x32xf32>
      %281 = arith.subf %279, %280 : vector<8x32xf32>
      %282 = vector.broadcast %133 : vector<8x1xf32> to vector<8x32xf32>
      %283 = arith.mulf %282, %281 : vector<8x32xf32>
      %284 = arith.addf %277, %283 : vector<8x32xf32>
      %cst_82 = arith.constant 0.000000e+00 : f32
      %285 = vector.broadcast %cst_82 : f32 to vector<8x32xf32>
      %286 = arith.cmpf olt, %284, %285 : vector<8x32xf32>
      %287 = arith.select %286, %272, %270 : vector<8x32xi1>, vector<8x32xf32>
      %cst_83 = arith.constant 9.765625E-4 : f32
      %288 = vector.broadcast %cst_83 : f32 to vector<8x32xf32>
      %289 = arith.addf %287, %288 : vector<8x32xf32>
      %290 = arith.subf %289, %130 : vector<8x32xf32>
      %cst_84 = arith.constant 1.000000e+00 : f32
      %291 = vector.broadcast %cst_84 : f32 to vector<8x32xf32>
      %292 = arith.subf %291, %289 : vector<8x32xf32>
      %293 = arith.mulf %289, %292 : vector<8x32xf32>
      %294 = arith.mulf %290, %293 : vector<8x32xf32>
      %cst_85 = arith.constant 2.000000e+00 : f32
      %295 = vector.broadcast %cst_85 : f32 to vector<8x32xf32>
      %296 = arith.mulf %295, %289 : vector<8x32xf32>
      %cst_86 = arith.constant 1.000000e+00 : f32
      %297 = vector.broadcast %cst_86 : f32 to vector<8x32xf32>
      %298 = arith.subf %296, %297 : vector<8x32xf32>
      %299 = vector.broadcast %133 : vector<8x1xf32> to vector<8x32xf32>
      %300 = arith.mulf %299, %298 : vector<8x32xf32>
      %301 = arith.addf %294, %300 : vector<8x32xf32>
      %cst_87 = arith.constant 0.000000e+00 : f32
      %302 = vector.broadcast %cst_87 : f32 to vector<8x32xf32>
      %303 = arith.cmpf olt, %301, %302 : vector<8x32xf32>
      %304 = arith.select %303, %289, %287 : vector<8x32xi1>, vector<8x32xf32>
      %cst_88 = arith.constant 4.8828125E-4 : f32
      %305 = vector.broadcast %cst_88 : f32 to vector<8x32xf32>
      %306 = arith.addf %304, %305 : vector<8x32xf32>
      %307 = arith.subf %306, %130 : vector<8x32xf32>
      %cst_89 = arith.constant 1.000000e+00 : f32
      %308 = vector.broadcast %cst_89 : f32 to vector<8x32xf32>
      %309 = arith.subf %308, %306 : vector<8x32xf32>
      %310 = arith.mulf %306, %309 : vector<8x32xf32>
      %311 = arith.mulf %307, %310 : vector<8x32xf32>
      %cst_90 = arith.constant 2.000000e+00 : f32
      %312 = vector.broadcast %cst_90 : f32 to vector<8x32xf32>
      %313 = arith.mulf %312, %306 : vector<8x32xf32>
      %cst_91 = arith.constant 1.000000e+00 : f32
      %314 = vector.broadcast %cst_91 : f32 to vector<8x32xf32>
      %315 = arith.subf %313, %314 : vector<8x32xf32>
      %316 = vector.broadcast %133 : vector<8x1xf32> to vector<8x32xf32>
      %317 = arith.mulf %316, %315 : vector<8x32xf32>
      %318 = arith.addf %311, %317 : vector<8x32xf32>
      %cst_92 = arith.constant 0.000000e+00 : f32
      %319 = vector.broadcast %cst_92 : f32 to vector<8x32xf32>
      %320 = arith.cmpf olt, %318, %319 : vector<8x32xf32>
      %321 = arith.select %320, %306, %304 : vector<8x32xi1>, vector<8x32xf32>
      %cst_93 = arith.constant 2.44140625E-4 : f32
      %322 = vector.broadcast %cst_93 : f32 to vector<8x32xf32>
      %323 = arith.addf %321, %322 : vector<8x32xf32>
      %324 = arith.subf %323, %130 : vector<8x32xf32>
      %cst_94 = arith.constant 1.000000e+00 : f32
      %325 = vector.broadcast %cst_94 : f32 to vector<8x32xf32>
      %326 = arith.subf %325, %323 : vector<8x32xf32>
      %327 = arith.mulf %323, %326 : vector<8x32xf32>
      %328 = arith.mulf %324, %327 : vector<8x32xf32>
      %cst_95 = arith.constant 2.000000e+00 : f32
      %329 = vector.broadcast %cst_95 : f32 to vector<8x32xf32>
      %330 = arith.mulf %329, %323 : vector<8x32xf32>
      %cst_96 = arith.constant 1.000000e+00 : f32
      %331 = vector.broadcast %cst_96 : f32 to vector<8x32xf32>
      %332 = arith.subf %330, %331 : vector<8x32xf32>
      %333 = vector.broadcast %133 : vector<8x1xf32> to vector<8x32xf32>
      %334 = arith.mulf %333, %332 : vector<8x32xf32>
      %335 = arith.addf %328, %334 : vector<8x32xf32>
      %cst_97 = arith.constant 0.000000e+00 : f32
      %336 = vector.broadcast %cst_97 : f32 to vector<8x32xf32>
      %337 = arith.cmpf olt, %335, %336 : vector<8x32xf32>
      %338 = arith.select %337, %323, %321 : vector<8x32xi1>, vector<8x32xf32>
      %cst_98 = arith.constant 1.22070313E-4 : f32
      %339 = vector.broadcast %cst_98 : f32 to vector<8x32xf32>
      %340 = arith.addf %338, %339 : vector<8x32xf32>
      %341 = arith.subf %340, %130 : vector<8x32xf32>
      %cst_99 = arith.constant 1.000000e+00 : f32
      %342 = vector.broadcast %cst_99 : f32 to vector<8x32xf32>
      %343 = arith.subf %342, %340 : vector<8x32xf32>
      %344 = arith.mulf %340, %343 : vector<8x32xf32>
      %345 = arith.mulf %341, %344 : vector<8x32xf32>
      %cst_100 = arith.constant 2.000000e+00 : f32
      %346 = vector.broadcast %cst_100 : f32 to vector<8x32xf32>
      %347 = arith.mulf %346, %340 : vector<8x32xf32>
      %cst_101 = arith.constant 1.000000e+00 : f32
      %348 = vector.broadcast %cst_101 : f32 to vector<8x32xf32>
      %349 = arith.subf %347, %348 : vector<8x32xf32>
      %350 = vector.broadcast %133 : vector<8x1xf32> to vector<8x32xf32>
      %351 = arith.mulf %350, %349 : vector<8x32xf32>
      %352 = arith.addf %345, %351 : vector<8x32xf32>
      %cst_102 = arith.constant 0.000000e+00 : f32
      %353 = vector.broadcast %cst_102 : f32 to vector<8x32xf32>
      %354 = arith.cmpf olt, %352, %353 : vector<8x32xf32>
      %355 = arith.select %354, %340, %338 : vector<8x32xi1>, vector<8x32xf32>
      %cst_103 = arith.constant 6.10351563E-5 : f32
      %356 = vector.broadcast %cst_103 : f32 to vector<8x32xf32>
      %357 = arith.addf %355, %356 : vector<8x32xf32>
      %358 = arith.subf %357, %130 : vector<8x32xf32>
      %cst_104 = arith.constant 1.000000e+00 : f32
      %359 = vector.broadcast %cst_104 : f32 to vector<8x32xf32>
      %360 = arith.subf %359, %357 : vector<8x32xf32>
      %361 = arith.mulf %357, %360 : vector<8x32xf32>
      %362 = arith.mulf %358, %361 : vector<8x32xf32>
      %cst_105 = arith.constant 2.000000e+00 : f32
      %363 = vector.broadcast %cst_105 : f32 to vector<8x32xf32>
      %364 = arith.mulf %363, %357 : vector<8x32xf32>
      %cst_106 = arith.constant 1.000000e+00 : f32
      %365 = vector.broadcast %cst_106 : f32 to vector<8x32xf32>
      %366 = arith.subf %364, %365 : vector<8x32xf32>
      %367 = vector.broadcast %133 : vector<8x1xf32> to vector<8x32xf32>
      %368 = arith.mulf %367, %366 : vector<8x32xf32>
      %369 = arith.addf %362, %368 : vector<8x32xf32>
      %cst_107 = arith.constant 0.000000e+00 : f32
      %370 = vector.broadcast %cst_107 : f32 to vector<8x32xf32>
      %371 = arith.cmpf olt, %369, %370 : vector<8x32xf32>
      %372 = arith.select %371, %357, %355 : vector<8x32xi1>, vector<8x32xf32>
      %cst_108 = arith.constant 3.05175781E-5 : f32
      %373 = vector.broadcast %cst_108 : f32 to vector<8x32xf32>
      %374 = arith.addf %372, %373 : vector<8x32xf32>
      %375 = arith.subf %374, %130 : vector<8x32xf32>
      %cst_109 = arith.constant 1.000000e+00 : f32
      %376 = vector.broadcast %cst_109 : f32 to vector<8x32xf32>
      %377 = arith.subf %376, %374 : vector<8x32xf32>
      %378 = arith.mulf %374, %377 : vector<8x32xf32>
      %379 = arith.mulf %375, %378 : vector<8x32xf32>
      %cst_110 = arith.constant 2.000000e+00 : f32
      %380 = vector.broadcast %cst_110 : f32 to vector<8x32xf32>
      %381 = arith.mulf %380, %374 : vector<8x32xf32>
      %cst_111 = arith.constant 1.000000e+00 : f32
      %382 = vector.broadcast %cst_111 : f32 to vector<8x32xf32>
      %383 = arith.subf %381, %382 : vector<8x32xf32>
      %384 = vector.broadcast %133 : vector<8x1xf32> to vector<8x32xf32>
      %385 = arith.mulf %384, %383 : vector<8x32xf32>
      %386 = arith.addf %379, %385 : vector<8x32xf32>
      %cst_112 = arith.constant 0.000000e+00 : f32
      %387 = vector.broadcast %cst_112 : f32 to vector<8x32xf32>
      %388 = arith.cmpf olt, %386, %387 : vector<8x32xf32>
      %389 = arith.select %388, %374, %372 : vector<8x32xi1>, vector<8x32xf32>
      %cst_113 = arith.constant 1.52587891E-5 : f32
      %390 = vector.broadcast %cst_113 : f32 to vector<8x32xf32>
      %391 = arith.addf %389, %390 : vector<8x32xf32>
      %392 = arith.subf %391, %130 : vector<8x32xf32>
      %cst_114 = arith.constant 1.000000e+00 : f32
      %393 = vector.broadcast %cst_114 : f32 to vector<8x32xf32>
      %394 = arith.subf %393, %391 : vector<8x32xf32>
      %395 = arith.mulf %391, %394 : vector<8x32xf32>
      %396 = arith.mulf %392, %395 : vector<8x32xf32>
      %cst_115 = arith.constant 2.000000e+00 : f32
      %397 = vector.broadcast %cst_115 : f32 to vector<8x32xf32>
      %398 = arith.mulf %397, %391 : vector<8x32xf32>
      %cst_116 = arith.constant 1.000000e+00 : f32
      %399 = vector.broadcast %cst_116 : f32 to vector<8x32xf32>
      %400 = arith.subf %398, %399 : vector<8x32xf32>
      %401 = vector.broadcast %133 : vector<8x1xf32> to vector<8x32xf32>
      %402 = arith.mulf %401, %400 : vector<8x32xf32>
      %403 = arith.addf %396, %402 : vector<8x32xf32>
      %cst_117 = arith.constant 0.000000e+00 : f32
      %404 = vector.broadcast %cst_117 : f32 to vector<8x32xf32>
      %405 = arith.cmpf olt, %403, %404 : vector<8x32xf32>
      %406 = arith.select %405, %391, %389 : vector<8x32xi1>, vector<8x32xf32>
      %cst_118 = arith.constant 7.62939453E-6 : f32
      %407 = vector.broadcast %cst_118 : f32 to vector<8x32xf32>
      %408 = arith.addf %406, %407 : vector<8x32xf32>
      %409 = arith.subf %408, %130 : vector<8x32xf32>
      %cst_119 = arith.constant 1.000000e+00 : f32
      %410 = vector.broadcast %cst_119 : f32 to vector<8x32xf32>
      %411 = arith.subf %410, %408 : vector<8x32xf32>
      %412 = arith.mulf %408, %411 : vector<8x32xf32>
      %413 = arith.mulf %409, %412 : vector<8x32xf32>
      %cst_120 = arith.constant 2.000000e+00 : f32
      %414 = vector.broadcast %cst_120 : f32 to vector<8x32xf32>
      %415 = arith.mulf %414, %408 : vector<8x32xf32>
      %cst_121 = arith.constant 1.000000e+00 : f32
      %416 = vector.broadcast %cst_121 : f32 to vector<8x32xf32>
      %417 = arith.subf %415, %416 : vector<8x32xf32>
      %418 = vector.broadcast %133 : vector<8x1xf32> to vector<8x32xf32>
      %419 = arith.mulf %418, %417 : vector<8x32xf32>
      %420 = arith.addf %413, %419 : vector<8x32xf32>
      %cst_122 = arith.constant 0.000000e+00 : f32
      %421 = vector.broadcast %cst_122 : f32 to vector<8x32xf32>
      %422 = arith.cmpf olt, %420, %421 : vector<8x32xf32>
      %423 = arith.select %422, %408, %406 : vector<8x32xi1>, vector<8x32xf32>
      %cst_123 = arith.constant 3.81469727E-6 : f32
      %424 = vector.broadcast %cst_123 : f32 to vector<8x32xf32>
      %425 = arith.addf %423, %424 : vector<8x32xf32>
      %426 = arith.subf %425, %130 : vector<8x32xf32>
      %cst_124 = arith.constant 1.000000e+00 : f32
      %427 = vector.broadcast %cst_124 : f32 to vector<8x32xf32>
      %428 = arith.subf %427, %425 : vector<8x32xf32>
      %429 = arith.mulf %425, %428 : vector<8x32xf32>
      %430 = arith.mulf %426, %429 : vector<8x32xf32>
      %cst_125 = arith.constant 2.000000e+00 : f32
      %431 = vector.broadcast %cst_125 : f32 to vector<8x32xf32>
      %432 = arith.mulf %431, %425 : vector<8x32xf32>
      %cst_126 = arith.constant 1.000000e+00 : f32
      %433 = vector.broadcast %cst_126 : f32 to vector<8x32xf32>
      %434 = arith.subf %432, %433 : vector<8x32xf32>
      %435 = vector.broadcast %133 : vector<8x1xf32> to vector<8x32xf32>
      %436 = arith.mulf %435, %434 : vector<8x32xf32>
      %437 = arith.addf %430, %436 : vector<8x32xf32>
      %cst_127 = arith.constant 0.000000e+00 : f32
      %438 = vector.broadcast %cst_127 : f32 to vector<8x32xf32>
      %439 = arith.cmpf olt, %437, %438 : vector<8x32xf32>
      %440 = arith.select %439, %425, %423 : vector<8x32xi1>, vector<8x32xf32>
      %cst_128 = arith.constant 1.90734863E-6 : f32
      %441 = vector.broadcast %cst_128 : f32 to vector<8x32xf32>
      %442 = arith.addf %440, %441 : vector<8x32xf32>
      %443 = arith.subf %442, %130 : vector<8x32xf32>
      %cst_129 = arith.constant 1.000000e+00 : f32
      %444 = vector.broadcast %cst_129 : f32 to vector<8x32xf32>
      %445 = arith.subf %444, %442 : vector<8x32xf32>
      %446 = arith.mulf %442, %445 : vector<8x32xf32>
      %447 = arith.mulf %443, %446 : vector<8x32xf32>
      %cst_130 = arith.constant 2.000000e+00 : f32
      %448 = vector.broadcast %cst_130 : f32 to vector<8x32xf32>
      %449 = arith.mulf %448, %442 : vector<8x32xf32>
      %cst_131 = arith.constant 1.000000e+00 : f32
      %450 = vector.broadcast %cst_131 : f32 to vector<8x32xf32>
      %451 = arith.subf %449, %450 : vector<8x32xf32>
      %452 = vector.broadcast %133 : vector<8x1xf32> to vector<8x32xf32>
      %453 = arith.mulf %452, %451 : vector<8x32xf32>
      %454 = arith.addf %447, %453 : vector<8x32xf32>
      %cst_132 = arith.constant 0.000000e+00 : f32
      %455 = vector.broadcast %cst_132 : f32 to vector<8x32xf32>
      %456 = arith.cmpf olt, %454, %455 : vector<8x32xf32>
      %457 = arith.select %456, %442, %440 : vector<8x32xi1>, vector<8x32xf32>
      %cst_133 = arith.constant 9.53674316E-7 : f32
      %458 = vector.broadcast %cst_133 : f32 to vector<8x32xf32>
      %459 = arith.addf %457, %458 : vector<8x32xf32>
      %460 = arith.subf %459, %130 : vector<8x32xf32>
      %cst_134 = arith.constant 1.000000e+00 : f32
      %461 = vector.broadcast %cst_134 : f32 to vector<8x32xf32>
      %462 = arith.subf %461, %459 : vector<8x32xf32>
      %463 = arith.mulf %459, %462 : vector<8x32xf32>
      %464 = arith.mulf %460, %463 : vector<8x32xf32>
      %cst_135 = arith.constant 2.000000e+00 : f32
      %465 = vector.broadcast %cst_135 : f32 to vector<8x32xf32>
      %466 = arith.mulf %465, %459 : vector<8x32xf32>
      %cst_136 = arith.constant 1.000000e+00 : f32
      %467 = vector.broadcast %cst_136 : f32 to vector<8x32xf32>
      %468 = arith.subf %466, %467 : vector<8x32xf32>
      %469 = vector.broadcast %133 : vector<8x1xf32> to vector<8x32xf32>
      %470 = arith.mulf %469, %468 : vector<8x32xf32>
      %471 = arith.addf %464, %470 : vector<8x32xf32>
      %cst_137 = arith.constant 0.000000e+00 : f32
      %472 = vector.broadcast %cst_137 : f32 to vector<8x32xf32>
      %473 = arith.cmpf olt, %471, %472 : vector<8x32xf32>
      %474 = arith.select %473, %459, %457 : vector<8x32xi1>, vector<8x32xf32>
      %cst_138 = arith.constant 4.76837158E-7 : f32
      %475 = vector.broadcast %cst_138 : f32 to vector<8x32xf32>
      %476 = arith.addf %474, %475 : vector<8x32xf32>
      %477 = arith.subf %476, %130 : vector<8x32xf32>
      %cst_139 = arith.constant 1.000000e+00 : f32
      %478 = vector.broadcast %cst_139 : f32 to vector<8x32xf32>
      %479 = arith.subf %478, %476 : vector<8x32xf32>
      %480 = arith.mulf %476, %479 : vector<8x32xf32>
      %481 = arith.mulf %477, %480 : vector<8x32xf32>
      %cst_140 = arith.constant 2.000000e+00 : f32
      %482 = vector.broadcast %cst_140 : f32 to vector<8x32xf32>
      %483 = arith.mulf %482, %476 : vector<8x32xf32>
      %cst_141 = arith.constant 1.000000e+00 : f32
      %484 = vector.broadcast %cst_141 : f32 to vector<8x32xf32>
      %485 = arith.subf %483, %484 : vector<8x32xf32>
      %486 = vector.broadcast %133 : vector<8x1xf32> to vector<8x32xf32>
      %487 = arith.mulf %486, %485 : vector<8x32xf32>
      %488 = arith.addf %481, %487 : vector<8x32xf32>
      %cst_142 = arith.constant 0.000000e+00 : f32
      %489 = vector.broadcast %cst_142 : f32 to vector<8x32xf32>
      %490 = arith.cmpf olt, %488, %489 : vector<8x32xf32>
      %491 = arith.select %490, %476, %474 : vector<8x32xi1>, vector<8x32xf32>
      %cst_143 = arith.constant 2.38418579E-7 : f32
      %492 = vector.broadcast %cst_143 : f32 to vector<8x32xf32>
      %493 = arith.addf %491, %492 : vector<8x32xf32>
      %494 = arith.subf %493, %130 : vector<8x32xf32>
      %cst_144 = arith.constant 1.000000e+00 : f32
      %495 = vector.broadcast %cst_144 : f32 to vector<8x32xf32>
      %496 = arith.subf %495, %493 : vector<8x32xf32>
      %497 = arith.mulf %493, %496 : vector<8x32xf32>
      %498 = arith.mulf %494, %497 : vector<8x32xf32>
      %cst_145 = arith.constant 2.000000e+00 : f32
      %499 = vector.broadcast %cst_145 : f32 to vector<8x32xf32>
      %500 = arith.mulf %499, %493 : vector<8x32xf32>
      %cst_146 = arith.constant 1.000000e+00 : f32
      %501 = vector.broadcast %cst_146 : f32 to vector<8x32xf32>
      %502 = arith.subf %500, %501 : vector<8x32xf32>
      %503 = vector.broadcast %133 : vector<8x1xf32> to vector<8x32xf32>
      %504 = arith.mulf %503, %502 : vector<8x32xf32>
      %505 = arith.addf %498, %504 : vector<8x32xf32>
      %cst_147 = arith.constant 0.000000e+00 : f32
      %506 = vector.broadcast %cst_147 : f32 to vector<8x32xf32>
      %507 = arith.cmpf olt, %505, %506 : vector<8x32xf32>
      %508 = arith.select %507, %493, %491 : vector<8x32xi1>, vector<8x32xf32>
      %cst_148 = arith.constant 1.1920929E-7 : f32
      %509 = vector.broadcast %cst_148 : f32 to vector<8x32xf32>
      %510 = arith.addf %508, %509 : vector<8x32xf32>
      %511 = arith.subf %510, %130 : vector<8x32xf32>
      %cst_149 = arith.constant 1.000000e+00 : f32
      %512 = vector.broadcast %cst_149 : f32 to vector<8x32xf32>
      %513 = arith.subf %512, %510 : vector<8x32xf32>
      %514 = arith.mulf %510, %513 : vector<8x32xf32>
      %515 = arith.mulf %511, %514 : vector<8x32xf32>
      %cst_150 = arith.constant 2.000000e+00 : f32
      %516 = vector.broadcast %cst_150 : f32 to vector<8x32xf32>
      %517 = arith.mulf %516, %510 : vector<8x32xf32>
      %cst_151 = arith.constant 1.000000e+00 : f32
      %518 = vector.broadcast %cst_151 : f32 to vector<8x32xf32>
      %519 = arith.subf %517, %518 : vector<8x32xf32>
      %520 = vector.broadcast %133 : vector<8x1xf32> to vector<8x32xf32>
      %521 = arith.mulf %520, %519 : vector<8x32xf32>
      %522 = arith.addf %515, %521 : vector<8x32xf32>
      %cst_152 = arith.constant 0.000000e+00 : f32
      %523 = vector.broadcast %cst_152 : f32 to vector<8x32xf32>
      %524 = arith.cmpf olt, %522, %523 : vector<8x32xf32>
      %525 = arith.select %524, %510, %508 : vector<8x32xi1>, vector<8x32xf32>
      %cst_153 = arith.constant 5.96046448E-8 : f32
      %526 = vector.broadcast %cst_153 : f32 to vector<8x32xf32>
      %527 = arith.addf %525, %526 : vector<8x32xf32>
      %528 = arith.subf %527, %130 : vector<8x32xf32>
      %cst_154 = arith.constant 1.000000e+00 : f32
      %529 = vector.broadcast %cst_154 : f32 to vector<8x32xf32>
      %530 = arith.subf %529, %527 : vector<8x32xf32>
      %531 = arith.mulf %527, %530 : vector<8x32xf32>
      %532 = arith.mulf %528, %531 : vector<8x32xf32>
      %cst_155 = arith.constant 2.000000e+00 : f32
      %533 = vector.broadcast %cst_155 : f32 to vector<8x32xf32>
      %534 = arith.mulf %533, %527 : vector<8x32xf32>
      %cst_156 = arith.constant 1.000000e+00 : f32
      %535 = vector.broadcast %cst_156 : f32 to vector<8x32xf32>
      %536 = arith.subf %534, %535 : vector<8x32xf32>
      %537 = vector.broadcast %133 : vector<8x1xf32> to vector<8x32xf32>
      %538 = arith.mulf %537, %536 : vector<8x32xf32>
      %539 = arith.addf %532, %538 : vector<8x32xf32>
      %cst_157 = arith.constant 0.000000e+00 : f32
      %540 = vector.broadcast %cst_157 : f32 to vector<8x32xf32>
      %541 = arith.cmpf olt, %539, %540 : vector<8x32xf32>
      %542 = arith.select %541, %527, %525 : vector<8x32xi1>, vector<8x32xf32>
      %cst_158 = arith.constant 2.98023224E-8 : f32
      %543 = vector.broadcast %cst_158 : f32 to vector<8x32xf32>
      %544 = arith.addf %542, %543 : vector<8x32xf32>
      %cst_159 = arith.constant dense<0.000000e+00> : vector<8x32xf32>
      %545 = tpu.matmul %544, %2, %cst_159 {dimension_numbers = #tpu.dot_dimension_numbers<[1], [0], [0], [1], [0, 0, 1, 1], [], []>} : vector<8x32xf32>, vector<32x32xf32>, vector<8x32xf32> -> vector<8x32xf32>
      scf.yield %545 : vector<8x32xf32>
    }
    %c20_i32_11 = arith.constant 20 : i32
    %c0_12 = arith.constant 0 : index
    %c0_13 = arith.constant 0 : index
    %31 = vector.load %arg11[%c0_12, %c0_13] : memref<8x32xf32, #tpu.memory_space<vmem>>, vector<8x32xf32>
    tpu.vector_store %arg11[%c0_12, %c0_13], %30 {strides = array<i32>} : memref<8x32xf32, #tpu.memory_space<vmem>>, vector<8x32xf32>,
    return
  }
  func.func @transform_0(%arg0: i32) -> (i32, i32) {
    %c0_i32 = arith.constant 0 : i32
    %c0_i32_0 = arith.constant 0 : i32
    return %arg0, %c0_i32 : i32, i32
  }
  func.func @transform_1(%arg0: i32) -> (i32, i32) {
    %c0_i32 = arith.constant 0 : i32
    %c0_i32_0 = arith.constant 0 : i32
    return %arg0, %c0_i32 : i32, i32
  }
  func.func @transform_2(%arg0: i32) -> (i32, i32) {
    %c0_i32 = arith.constant 0 : i32
    %c0_i32_0 = arith.constant 0 : i32
    %c0_i32_1 = arith.constant 0 : i32
    return %c0_i32, %c0_i32_0 : i32, i32
  }
  func.func @transform_3(%arg0: i32) -> (i32, i32) {
    %c0_i32 = arith.constant 0 : i32
    %c0_i32_0 = arith.constant 0 : i32
    %c0_i32_1 = arith.constant 0 : i32
    return %c0_i32, %c0_i32_0 : i32, i32
  }
  func.func @transform_4(%arg0: i32) -> (i32, i32) {
    %c0_i32 = arith.constant 0 : i32
    %c0_i32_0 = arith.constant 0 : i32
    %c0_i32_1 = arith.constant 0 : i32
    return %c0_i32, %c0_i32_0 : i32, i32
  }
  func.func @transform_5(%arg0: i32) -> i32 {
    %c0_i32 = arith.constant 0 : i32
    %c0_i32_0 = arith.constant 0 : i32
    return %c0_i32 : i32
  }
  func.func @transform_6(%arg0: i32) -> (i32, i32, i32) {
    %c0_i32 = arith.constant 0 : i32
    %c0_i32_0 = arith.constant 0 : i32
    %c0_i32_1 = arith.constant 0 : i32
    %c0_i32_2 = arith.constant 0 : i32
    return %c0_i32, %c0_i32_0, %c0_i32_1 : i32, i32, i32
  }
  func.func @transform_7(%arg0: i32) -> (i32, i32, i32) {
    %c0_i32 = arith.constant 0 : i32
    %c0_i32_0 = arith.constant 0 : i32
    %c0_i32_1 = arith.constant 0 : i32
    %c0_i32_2 = arith.constant 0 : i32
    return %c0_i32, %c0_i32_0, %c0_i32_1 : i32, i32, i32
  }
  func.func @transform_8(%arg0: i32) -> (i32, i32, i32) {
    %c0_i32 = arith.constant 0 : i32
    %c0_i32_0 = arith.constant 0 : i32
    %c0_i32_1 = arith.constant 0 : i32
    %c0_i32_2 = arith.constant 0 : i32
    return %c0_i32, %c0_i32_0, %c0_i32_1 : i32, i32, i32
  }
  func.func @transform_9(%arg0: i32) -> (i32, i32, i32) {
    %c0_i32 = arith.constant 0 : i32
    %c0_i32_0 = arith.constant 0 : i32
    %c0_i32_1 = arith.constant 0 : i32
    %c0_i32_2 = arith.constant 0 : i32
    return %c0_i32, %c0_i32_0, %c0_i32_1 : i32, i32, i32
  }
  func.func @transform_10(%arg0: i32) -> (i32, i32) {
    %c0_i32 = arith.constant 0 : i32
    %c0_i32_0 = arith.constant 0 : i32
    return %arg0, %c0_i32 : i32, i32
  }
}

</mosaic_0001>

<llo_original>
// kernel: my_model_forward.1
$region0: #{my_model_forward.1}
  #allocation0 [shape = 'u32[]', space=smem, size = 0x4, offset = 0x4, fixed_abs, tag = 'smem constant byte address 0x4 - core index']
  #allocation1 [shape = 'u32[72,128]{1,0:T(1,128)}', space=vmem, size = 0x9000, scoped, tag = 'internal scratch']
  %s0 = inlined_call_operand.vmem [shape: f32[8,32], index: 0, kind: input, shape index: {}]
  %s1 = inlined_call_operand.vmem [shape: f32[8,32], index: 1, kind: input, shape index: {}]
  %s2 = inlined_call_operand.vmem [shape: f32[32,32], index: 2, kind: input, shape index: {}]
  %s3 = inlined_call_operand.vmem [shape: f32[32,32], index: 3, kind: input, shape index: {}]
  %s4 = inlined_call_operand.vmem [shape: f32[4,32], index: 4, kind: input, shape index: {}]
  %s5 = inlined_call_operand.vmem [shape: f32[160], index: 5, kind: input, shape index: {}]
  %s6 = inlined_call_operand.vmem [shape: f32[20,32,64], index: 6, kind: input, shape index: {}]
  %s7 = inlined_call_operand.vmem [shape: f32[20,1,64], index: 7, kind: input, shape index: {}]
  %s8 = inlined_call_operand.vmem [shape: f32[20,64,16], index: 8, kind: input, shape index: {}]
  %s9 = inlined_call_operand.vmem [shape: f32[20,1,16], index: 9, kind: input, shape index: {}]
  %s10 = inlined_call_operand.vmem [shape: f32[8,32], index: 10, kind: output, shape index: {}]
  %s11 = sld [smem:[#allocation0]]
  $region61: #{my_model_forward.1} parent=0
    _
  %s13 = ssub.s32 1, %s11
  %s14 = scalar_select 0, %s13, %s11
  $region1: #{my_model_forward.1} parent=0
    #allocation2 [shape = 'u8[1024]{0}', space=smem, size = 0x400, scoped, tag = 'input window, operand 5, single buffered']
    #allocation3 [shape = 's32[1]{0}', space=sflag, size = 0x4, scoped, tag = 'scoped memory for my_model_forward.1']
    %15 = vsyncpa [#allocation3], 0
    // Predicated region
    $region2: #{my_model_forward.1} parent=1 // pred_check
      _
    $region3: #{my_model_forward.1} parent=1 // pred_check_branch
      %17 = sbr.rel (0) target = $region5
    $region4: #{my_model_forward.1} parent=1 // pred_region
      _
    $region5: #{my_model_forward.1} parent=1 // pred_fallthru
      _
    // Predicated region
    $region6: #{my_model_forward.1} parent=1 // pred_check
      _
    $region7: #{my_model_forward.1} parent=1 // pred_check_branch
      %19 = sbr.rel (0) target = $region9
    $region8: #{my_model_forward.1} parent=1 // pred_region
      _
    $region9: #{my_model_forward.1} parent=1 // pred_fallthru
      _
    // Predicated region
    $region10: #{my_model_forward.1} parent=1 // pred_check
      _
    $region11: #{my_model_forward.1} parent=1 // pred_check_branch
      %21 = sbr.rel (0) target = $region13
    $region12: #{my_model_forward.1} parent=1 // pred_region
      _
    $region13: #{my_model_forward.1} parent=1 // pred_fallthru
      _
    // Predicated region
    $region14: #{my_model_forward.1} parent=1 // pred_check
      _
    $region15: #{my_model_forward.1} parent=1 // pred_check_branch
      %23 = sbr.rel (0) target = $region17
    $region16: #{my_model_forward.1} parent=1 // pred_region
      _
    $region17: #{my_model_forward.1} parent=1 // pred_fallthru
      _
    // Predicated region
    $region18: #{my_model_forward.1} parent=1 // pred_check
      _
    $region19: #{my_model_forward.1} parent=1 // pred_check_branch
      %25 = sbr.rel (0) target = $region21
    $region20: #{my_model_forward.1} parent=1 // pred_region
      _
    $region21: #{my_model_forward.1} parent=1 // pred_fallthru
      _
    // Predicated region
    $region22: #{my_model_forward.1} parent=1 // pred_check
      _
    $region23: #{my_model_forward.1} parent=1 // pred_check_branch
      %27 = sbr.rel (0) target = $region25
    $region24: #{my_model_forward.1} parent=1 // pred_region
      %29 = vsyncadd [#allocation3], 0
      %s31 = sshll.u32 %s5, 4
      %s32 = int_to_ptr.vmem [resolvable:$true] %s31
      %34 = dma.vmem_to_smem %s32, 32, [#allocation2], [#allocation3]
    $region25: #{my_model_forward.1} parent=1 // pred_fallthru
      _
    // Predicated region
    $region26: #{my_model_forward.1} parent=1 // pred_check
      _
    $region27: #{my_model_forward.1} parent=1 // pred_check_branch
      %36 = sbr.rel (0) target = $region29
    $region28: #{my_model_forward.1} parent=1 // pred_region
      _
    $region29: #{my_model_forward.1} parent=1 // pred_fallthru
      _
    // Predicated region
    $region30: #{my_model_forward.1} parent=1 // pred_check
      _
    $region31: #{my_model_forward.1} parent=1 // pred_check_branch
      %38 = sbr.rel (0) target = $region33
    $region32: #{my_model_forward.1} parent=1 // pred_region
      _
    $region33: #{my_model_forward.1} parent=1 // pred_fallthru
      _
    // Predicated region
    $region34: #{my_model_forward.1} parent=1 // pred_check
      _
    $region35: #{my_model_forward.1} parent=1 // pred_check_branch
      %40 = sbr.rel (0) target = $region37
    $region36: #{my_model_forward.1} parent=1 // pred_region
      _
    $region37: #{my_model_forward.1} parent=1 // pred_fallthru
      _
    // Predicated region
    $region38: #{my_model_forward.1} parent=1 // pred_check
      _
    $region39: #{my_model_forward.1} parent=1 // pred_check_branch
      %42 = sbr.rel (0) target = $region41
    $region40: #{my_model_forward.1} parent=1 // pred_region
      _
    $region41: #{my_model_forward.1} parent=1 // pred_fallthru
      _
    // Predicated region
    $region42: #{my_model_forward.1} parent=1 // pred_check
      _
    $region43: #{my_model_forward.1} parent=1 // pred_check_branch
      %44 = sbr.rel (0) target = $region45
    $region44: #{my_model_forward.1} parent=1 // pred_region
      %46 = dma.done [#allocation3], 32
    $region45: #{my_model_forward.1} parent=1 // pred_fallthru
      _
    %47 = sfence
    %v48 = vld [vmem:[%s1] sm:$0xff]
    %v49 = vld [vmem:[%s2] sm:$0xff]
    %v50 = vld [vmem:[%s2 + $0x8] sm:$0xff]
    %v51 = vld [vmem:[%s2 + $0x10] sm:$0xff]
    %v52 = vld [vmem:[%s2 + $0x18] sm:$0xff]
    %v53 = vld [vmem:[%s3] sm:$0xff]
    %v54 = vld [vmem:[%s3 + $0x8] sm:$0xff]
    %v55 = vld [vmem:[%s3 + $0x10] sm:$0xff]
    %v56 = vld [vmem:[%s3 + $0x18] sm:$0xff]
    %v57 = vld [vmem:[%s4] sm:$0xf]
    %s58 = sld [smem:[#allocation2 + $0x2]]
    %v59 = vperm.slane %v57, 2
    %v60 = vmul.f32 %v48, %v59
    %v61 = vperm.slane %v57, 3
    %v62 = vmul.f32 %v48, %v61
    %v63 = vmul.f32 %v62, %v62
    %vm64 = vcmask 261120
    %v65 = vsel %vm64, %v63, 0.0
    %66 = vadd.xlane.f32.xlu0 %v65
    %v67 = vpop.xlane.xlu0 %66
    %v68 = vrsqrt.pop %v67
    %v69 = vmul.f32 %v68, %v67
    %v70 = vmul.f32 %v69, %v68
    %v71 = vmul.f32 0.5, %v70
    %v72 = vsub.f32 1.5, %v71
    %v73 = vmul.f32 %v68, %v72
    %v74 = vmul.f32 %v67, %v73
    %vm75 = vcmp.eq.f32.partialorder %v67, inf
    %v76 = vsel %vm75, %v67, %v74
    %vm77 = vcmp.eq.f32.partialorder %v67, 0.0
    %v78 = vand.u32 %v67, 2147483648
    %v79 = vsel %vm77, %v78, %v76
    %v80 = vmul.f32 %v60, %v60
    %v81 = vsel %vm64, %v80, 0.0
    %82 = vadd.xlane.f32.xlu0 %v81
    %v83 = vpop.xlane.xlu0 %82
    %v84 = vrsqrt.pop %v83
    %v85 = vmul.f32 %v84, %v83
    %v86 = vmul.f32 %v85, %v84
    %v87 = vmul.f32 0.5, %v86
    %v88 = vsub.f32 1.5, %v87
    %v89 = vmul.f32 %v84, %v88
    %v90 = vmul.f32 %v83, %v89
    %vm91 = vcmp.eq.f32.partialorder %v83, inf
    %v92 = vsel %vm91, %v83, %v90
    %vm93 = vcmp.eq.f32.partialorder %v83, 0.0
    %v94 = vand.u32 %v83, 2147483648
    %v95 = vsel %vm93, %v94, %v92
    %v96 = vadd.f32 %v95, 1e-20
    %v97 = vrcp.pop %v96
    %v98 = vmul.f32 %v96, %v97
    %v99 = vsub.f32 1.0, %v98
    %v100 = vmul.f32 %v97, %v99
    %v101 = vadd.f32 %v97, %v100
    %vm102 = vweird.f32 %v96
    %vm103 = vweird.f32 %v97
    %vm104 = vmor %vm102, %vm103
    %v105 = vsel %vm104, %v97, %v101
    %v106 = vand.u32 2147483647, %v96
    %vm107 = vcmp.eq.f32.partialorder %v106, 8.507059e+37
    %v108 = vand.u32 %v96, 2147483648
    %v109 = vor.u32 1.1754944e-38, %v108
    %v110 = vsel %vm107, %v109, %v105
    %v111 = vmul.f32 %v79, %v110
    %v112 = vlog2.pop %v111
    %v113 = vmul.f32 %v112, 0.6931472
    %v114 = vstv %s58
    %v115 = vmul.f32 %v114, %v113
    %v116 = vmul.f32 %v115, 1.442695
    %v117 = vpow.pop %v116
    %v118 = vld [vmem:[%s0] sm:$0xff]
    loop: start=0, step=1, limit=20
    $region46: #{my_model_forward.1} parent=1 // loop_pre_header
      _
    $region47: #{my_model_forward.1} parent=1 // loop_header
      %s120 = sphi 0, %s124
      %p121 = scmp.ge.s32.totalorder %s120, 20
      %v125 = vphi %v118, %v605
    $region48: #{my_model_forward.1} parent=1 // loop_header_branch
      %123 = sbr.rel (%p121) target = $region52
    $region49: #{my_model_forward.1} parent=1 // loop_body
      %s126 = smul.u32 %s120, 8
      %s127 = sld [smem:[#allocation2 + %s126]]
      %s128 = sadd.s32 %s126, 1
      %s129 = sld [smem:[#allocation2 + %s128]]
      %s130 = sadd.s32 %s126, 3
      %s131 = sld [smem:[#allocation2 + %s130]]
      %s132 = sadd.s32 %s126, 4
      %s133 = sld [smem:[#allocation2 + %s132]]
      %s134 = smul.u32 %s120, 32
      %s135 = scalar_lea.vmem %s6, %s134
      %v136 = vld [vmem:[%s135] sm:$0xff]
      %v137 = vld [vmem:[%s135 + $0x8] sm:$0xff]
      %v138 = vld [vmem:[%s135 + $0x10] sm:$0xff]
      %v139 = vld [vmem:[%s135 + $0x18] sm:$0xff]
      %s140 = scalar_lea.vmem %s7, %s120
      %v141 = vld [vmem:[%s140] sm:$0x1]
      %v143 = vperm.slane %v141, 0
      %v146 = vsel %vm64, %v125, 0
      %148 = vmatpush.msra.mxu0 0.0
      %149 = vmatpush.msra.mxu0 0.0
      %150 = vmatpush.msra.mxu0 0.0
      %151 = vmatpush.msra.mxu0 0.0
      %152 = vmatpush.msra.mxu0 0.0
      %153 = vmatpush.msra.mxu0 0.0
      %154 = vmatpush.msra.mxu0 0.0
      %155 = vmatpush.msra.mxu0 0.0
      %156 = vmatpush.msra.mxu0 0.0
      %157 = vmatpush.msra.mxu0 0.0
      %158 = vmatpush.msra.mxu0 0.0
      %159 = vmatpush.msra.mxu0 0.0
      %160 = vmatpush.msra.mxu0 %v139
      %161 = vmatpush.msra.mxu0 %v138
      %162 = vmatpush.msra.mxu0 %v137
      %163 = vmatpush.msra.mxu0 %v136
      %164 = vmatmul.f32.gmra.mxu0 %v146
      %v165 = vpop.f32.mrf.mxu0
      %v166 = vadd.f32 %v143, %v165
      %167 = vdwg.mxu0
      %v168 = vmax.f32 %v166, 0.0
      %vm169 = vcmp.ne.f32.partialorder %v166, %v166
      %v170 = vadd.f32 %v166, 0.0
      %v171 = vand.u32 2147483647, %v166
      %v172 = vsub.f32 0.0, %v171
      %v173 = vmul.f32 %v172, 1.442695
      %v174 = vpow.pop %v173
      %v175 = vadd.f32 %v174, 1.0
      %v176 = vlog2.pop %v175
      %v177 = vmul.f32 %v176, 0.6931472
      %v178 = vmul.f32 -0.5, %v174
      %v179 = vadd.f32 %v178, 1.0
      %v180 = vmul.f32 %v179, %v174
      %v181 = vand.u32 2147483647, %v174
      %vm182 = vcmp.lt.f32.partialorder %v181, 0.0004427343
      %v183 = vsel %vm182, %v180, %v177
      %v184 = vadd.f32 %v168, %v183
      %v185 = vsel %vm169, %v170, %v184
      %s186 = smul.u32 %s120, 64
      %s187 = scalar_lea.vmem %s8, %s186
      %v188 = vld [vmem:[%s187] sm:$0xff]
      %v189 = vld [vmem:[%s187 + $0x8] sm:$0xff]
      %v190 = vld [vmem:[%s187 + $0x10] sm:$0xff]
      %v191 = vld [vmem:[%s187 + $0x18] sm:$0xff]
      %v192 = vld [vmem:[%s187 + $0x20] sm:$0xff]
      %v193 = vld [vmem:[%s187 + $0x28] sm:$0xff]
      %v194 = vld [vmem:[%s187 + $0x30] sm:$0xff]
      %v195 = vld [vmem:[%s187 + $0x38] sm:$0xff]
      %v196 = vstv %s131
      %vm197 = vcmask 523264
      %v199 = vsel %vm197, %v185, 0
      %201 = vmatpush.msra.mxu0 0.0
      %202 = vmatpush.msra.mxu0 0.0
      %203 = vmatpush.msra.mxu0 0.0
      %204 = vmatpush.msra.mxu0 0.0
      %205 = vmatpush.msra.mxu0 0.0
      %206 = vmatpush.msra.mxu0 0.0
      %207 = vmatpush.msra.mxu0 0.0
      %208 = vmatpush.msra.mxu0 0.0
      %209 = vmatpush.msra.mxu0 %v195
      %210 = vmatpush.msra.mxu0 %v194
      %211 = vmatpush.msra.mxu0 %v193
      %212 = vmatpush.msra.mxu0 %v192
      %213 = vmatpush.msra.mxu0 %v191
      %214 = vmatpush.msra.mxu0 %v190
      %215 = vmatpush.msra.mxu0 %v189
      %216 = vmatpush.msra.mxu0 %v188
      %217 = vmatmul.f32.gmra.mxu0 %v199
      %v218 = vpop.f32.mrf.mxu0
      %v219 = vadd.f32 %v196, %v218
      %220 = vdwg.mxu0
      %v221 = vmax.f32 %v219, 0.0
      %vm222 = vcmp.ne.f32.partialorder %v219, %v219
      %v223 = vadd.f32 %v219, 0.0
      %v224 = vand.u32 2147483647, %v219
      %v225 = vsub.f32 0.0, %v224
      %v226 = vmul.f32 %v225, 1.442695
      %v227 = vpow.pop %v226
      %v228 = vadd.f32 %v227, 1.0
      %v229 = vlog2.pop %v228
      %v230 = vmul.f32 %v229, 0.6931472
      %v231 = vmul.f32 -0.5, %v227
      %v232 = vadd.f32 %v231, 1.0
      %v233 = vmul.f32 %v232, %v227
      %v234 = vand.u32 2147483647, %v227
      %vm235 = vcmp.lt.f32.partialorder %v234, 0.0004427343
      %v236 = vsel %vm235, %v233, %v230
      %v237 = vadd.f32 %v221, %v236
      %v238 = vsel %vm222, %v223, %v237
      %s239 = scalar_lea.vmem %s9, %s120
      %v240 = vld [vmem:[%s239] sm:$0x1]
      %v242 = vperm.slane %v240, 0
      %v244 = vmul.f32 %v238, %v242
      %vm245 = vcmask 130048
      %v246 = vsel %vm245, %v244, 0.0
      %247 = vadd.xlane.f32.xlu0 %v246
      %v248 = vpop.xlane.xlu0 %247
      %v249 = vstv %s133
      %v250 = vadd.f32 %v248, %v249
      %v251 = vmax.f32 %v250, 0.0
      %vm252 = vcmp.ne.f32.partialorder %v250, %v250
      %v253 = vadd.f32 %v250, 0.0
      %v254 = vand.u32 2147483647, %v250
      %v255 = vsub.f32 0.0, %v254
      %v256 = vmul.f32 %v255, 1.442695
      %v257 = vpow.pop %v256
      %v258 = vadd.f32 %v257, 1.0
      %v259 = vlog2.pop %v258
      %v260 = vmul.f32 %v259, 0.6931472
      %v261 = vmul.f32 -0.5, %v257
      %v262 = vadd.f32 %v261, 1.0
      %v263 = vmul.f32 %v262, %v257
      %v264 = vand.u32 2147483647, %v257
      %vm265 = vcmp.lt.f32.partialorder %v264, 0.0004427343
      %v266 = vsel %vm265, %v263, %v260
      %v267 = vadd.f32 %v251, %v266
      %v268 = vsel %vm252, %v253, %v267
      %v269 = vstv %s129
      %v270 = vmul.f32 %v117, %v269
      %v271 = vperm.slane %v57, 1
      %v272 = vmul.f32 %v270, %v271
      %v273 = vperm.slane %v57, 0
      %v274 = vadd.f32 %v273, %v272
      %v275 = vsel %vm64, %v274, -inf
      %276 = vmax.xlane.f32.xlu0 %v275
      %v277 = vpop.xlane.xlu0 %276
      %v278 = vstv %s127
      %v279 = vrcp.pop %v277
      %v280 = vmul.f32 %v277, %v279
      %v281 = vsub.f32 1.0, %v280
      %v282 = vmul.f32 %v279, %v281
      %v283 = vadd.f32 %v279, %v282
      %vm284 = vweird.f32 %v277
      %vm285 = vweird.f32 %v279
      %vm286 = vmor %vm284, %vm285
      %v287 = vsel %vm286, %v279, %v283
      %v288 = vand.u32 2147483647, %v277
      %vm289 = vcmp.eq.f32.partialorder %v288, 8.507059e+37
      %v290 = vand.u32 %v277, 2147483648
      %v291 = vor.u32 1.1754944e-38, %v290
      %v292 = vsel %vm289, %v291, %v287
      %v293 = vmul.f32 %v278, %v292
      %v294 = vmul.f32 %v293, %v274
      %v295 = vsub.f32 1.0, %v294
      %v296 = vmul.f32 %v125, %v295
      %v297 = vmul.f32 %v293, %v48
      %v298 = vadd.f32 %v296, %v297
      %v300 = vsel %vm64, %v298, 0
      %302 = vmatpush.msra.mxu0 0.0
      %303 = vmatpush.msra.mxu0 0.0
      %304 = vmatpush.msra.mxu0 0.0
      %305 = vmatpush.msra.mxu0 0.0
      %306 = vmatpush.msra.mxu0 0.0
      %307 = vmatpush.msra.mxu0 0.0
      %308 = vmatpush.msra.mxu0 0.0
      %309 = vmatpush.msra.mxu0 0.0
      %310 = vmatpush.msra.mxu0 0.0
      %311 = vmatpush.msra.mxu0 0.0
      %312 = vmatpush.msra.mxu0 0.0
      %313 = vmatpush.msra.mxu0 0.0
      %314 = vmatpush.msra.mxu0 %v52
      %315 = vmatpush.msra.mxu0 %v51
      %316 = vmatpush.msra.mxu0 %v50
      %317 = vmatpush.msra.mxu0 %v49
      %318 = vmatmul.f32.gmra.mxu0 %v300
      %v319 = vpop.f32.mrf.mxu0
      %v320 = vadd.f32 0.0, %v319
      %321 = vdwg.mxu0
      %v322 = vmul.f32 %v293, %v268
      %v323 = vmul.f32 %v322, 1e-06
      %v324 = vsub.f32 0.5, %v320
      %v325 = vmul.f32 %v324, 0.25
      %v326 = vmul.f32 %v323, 0.0
      %v327 = vadd.f32 %v325, %v326
      %vm328 = vcmp.lt.f32.partialorder %v327, 0.0
      %v329 = vsel %vm328, 0.5, 0.0
      %v330 = vadd.f32 %v329, 0.25
      %v331 = vsub.f32 %v330, %v320
      %v332 = vsub.f32 1.0, %v330
      %v333 = vmul.f32 %v330, %v332
      %v334 = vmul.f32 %v331, %v333
      %v335 = vmul.f32 %v330, 2.0
      %v336 = vsub.f32 %v335, 1.0
      %v337 = vmul.f32 %v323, %v336
      %v338 = vadd.f32 %v334, %v337
      %vm339 = vcmp.lt.f32.partialorder %v338, 0.0
      %v340 = vsel %vm339, %v330, %v329
      %v341 = vadd.f32 %v340, 0.125
      %v342 = vsub.f32 %v341, %v320
      %v343 = vsub.f32 1.0, %v341
      %v344 = vmul.f32 %v341, %v343
      %v345 = vmul.f32 %v342, %v344
      %v346 = vmul.f32 %v341, 2.0
      %v347 = vsub.f32 %v346, 1.0
      %v348 = vmul.f32 %v323, %v347
      %v349 = vadd.f32 %v345, %v348
      %vm350 = vcmp.lt.f32.partialorder %v349, 0.0
      %v351 = vsel %vm350, %v341, %v340
      %v352 = vadd.f32 %v351, 0.0625
      %v353 = vsub.f32 %v352, %v320
      %v354 = vsub.f32 1.0, %v352
      %v355 = vmul.f32 %v352, %v354
      %v356 = vmul.f32 %v353, %v355
      %v357 = vmul.f32 %v352, 2.0
      %v358 = vsub.f32 %v357, 1.0
      %v359 = vmul.f32 %v323, %v358
      %v360 = vadd.f32 %v356, %v359
      %vm361 = vcmp.lt.f32.partialorder %v360, 0.0
      %v362 = vsel %vm361, %v352, %v351
      %v363 = vadd.f32 %v362, 0.03125
      %v364 = vsub.f32 %v363, %v320
      %v365 = vsub.f32 1.0, %v363
      %v366 = vmul.f32 %v363, %v365
      %v367 = vmul.f32 %v364, %v366
      %v368 = vmul.f32 %v363, 2.0
      %v369 = vsub.f32 %v368, 1.0
      %v370 = vmul.f32 %v323, %v369
      %v371 = vadd.f32 %v367, %v370
      %vm372 = vcmp.lt.f32.partialorder %v371, 0.0
      %v373 = vsel %vm372, %v363, %v362
      %v374 = vadd.f32 %v373, 0.015625
      %v375 = vsub.f32 %v374, %v320
      %v376 = vsub.f32 1.0, %v374
      %v377 = vmul.f32 %v374, %v376
      %v378 = vmul.f32 %v375, %v377
      %v379 = vmul.f32 %v374, 2.0
      %v380 = vsub.f32 %v379, 1.0
      %v381 = vmul.f32 %v323, %v380
      %v382 = vadd.f32 %v378, %v381
      %vm383 = vcmp.lt.f32.partialorder %v382, 0.0
      %v384 = vsel %vm383, %v374, %v373
      %v385 = vadd.f32 %v384, 0.0078125
      %v386 = vsub.f32 %v385, %v320
      %v387 = vsub.f32 1.0, %v385
      %v388 = vmul.f32 %v385, %v387
      %v389 = vmul.f32 %v386, %v388
      %v390 = vmul.f32 %v385, 2.0
      %v391 = vsub.f32 %v390, 1.0
      %v392 = vmul.f32 %v323, %v391
      %v393 = vadd.f32 %v389, %v392
      %vm394 = vcmp.lt.f32.partialorder %v393, 0.0
      %v395 = vsel %vm394, %v385, %v384
      %v396 = vadd.f32 %v395, 0.00390625
      %v397 = vsub.f32 %v396, %v320
      %v398 = vsub.f32 1.0, %v396
      %v399 = vmul.f32 %v396, %v398
      %v400 = vmul.f32 %v397, %v399
      %v401 = vmul.f32 %v396, 2.0
      %v402 = vsub.f32 %v401, 1.0
      %v403 = vmul.f32 %v323, %v402
      %v404 = vadd.f32 %v400, %v403
      %vm405 = vcmp.lt.f32.partialorder %v404, 0.0
      %v406 = vsel %vm405, %v396, %v395
      %v407 = vadd.f32 %v406, 0.001953125
      %v408 = vsub.f32 %v407, %v320
      %v409 = vsub.f32 1.0, %v407
      %v410 = vmul.f32 %v407, %v409
      %v411 = vmul.f32 %v408, %v410
      %v412 = vmul.f32 %v407, 2.0
      %v413 = vsub.f32 %v412, 1.0
      %v414 = vmul.f32 %v323, %v413
      %v415 = vadd.f32 %v411, %v414
      %vm416 = vcmp.lt.f32.partialorder %v415, 0.0
      %v417 = vsel %vm416, %v407, %v406
      %v418 = vadd.f32 %v417, 0.0009765625
      %v419 = vsub.f32 %v418, %v320
      %v420 = vsub.f32 1.0, %v418
      %v421 = vmul.f32 %v418, %v420
      %v422 = vmul.f32 %v419, %v421
      %v423 = vmul.f32 %v418, 2.0
      %v424 = vsub.f32 %v423, 1.0
      %v425 = vmul.f32 %v323, %v424
      %v426 = vadd.f32 %v422, %v425
      %vm427 = vcmp.lt.f32.partialorder %v426, 0.0
      %v428 = vsel %vm427, %v418, %v417
      %v429 = vadd.f32 %v428, 0.00048828125
      %v430 = vsub.f32 %v429, %v320
      %v431 = vsub.f32 1.0, %v429
      %v432 = vmul.f32 %v429, %v431
      %v433 = vmul.f32 %v430, %v432
      %v434 = vmul.f32 %v429, 2.0
      %v435 = vsub.f32 %v434, 1.0
      %v436 = vmul.f32 %v323, %v435
      %v437 = vadd.f32 %v433, %v436
      %vm438 = vcmp.lt.f32.partialorder %v437, 0.0
      %v439 = vsel %vm438, %v429, %v428
      %v440 = vadd.f32 %v439, 0.00024414063
      %v441 = vsub.f32 %v440, %v320
      %v442 = vsub.f32 1.0, %v440
      %v443 = vmul.f32 %v440, %v442
      %v444 = vmul.f32 %v441, %v443
      %v445 = vmul.f32 %v440, 2.0
      %v446 = vsub.f32 %v445, 1.0
      %v447 = vmul.f32 %v323, %v446
      %v448 = vadd.f32 %v444, %v447
      %vm449 = vcmp.lt.f32.partialorder %v448, 0.0
      %v450 = vsel %vm449, %v440, %v439
      %v451 = vadd.f32 %v450, 0.00012207031
      %v452 = vsub.f32 %v451, %v320
      %v453 = vsub.f32 1.0, %v451
      %v454 = vmul.f32 %v451, %v453
      %v455 = vmul.f32 %v452, %v454
      %v456 = vmul.f32 %v451, 2.0
      %v457 = vsub.f32 %v456, 1.0
      %v458 = vmul.f32 %v323, %v457
      %v459 = vadd.f32 %v455, %v458
      %vm460 = vcmp.lt.f32.partialorder %v459, 0.0
      %v461 = vsel %vm460, %v451, %v450
      %v462 = vadd.f32 %v461, 6.1035156e-05
      %v463 = vsub.f32 %v462, %v320
      %v464 = vsub.f32 1.0, %v462
      %v465 = vmul.f32 %v462, %v464
      %v466 = vmul.f32 %v463, %v465
      %v467 = vmul.f32 %v462, 2.0
      %v468 = vsub.f32 %v467, 1.0
      %v469 = vmul.f32 %v323, %v468
      %v470 = vadd.f32 %v466, %v469
      %vm471 = vcmp.lt.f32.partialorder %v470, 0.0
      %v472 = vsel %vm471, %v462, %v461
      %v473 = vadd.f32 %v472, 3.0517578e-05
      %v474 = vsub.f32 %v473, %v320
      %v475 = vsub.f32 1.0, %v473
      %v476 = vmul.f32 %v473, %v475
      %v477 = vmul.f32 %v474, %v476
      %v478 = vmul.f32 %v473, 2.0
      %v479 = vsub.f32 %v478, 1.0
      %v480 = vmul.f32 %v323, %v479
      %v481 = vadd.f32 %v477, %v480
      %vm482 = vcmp.lt.f32.partialorder %v481, 0.0
      %v483 = vsel %vm482, %v473, %v472
      %v484 = vadd.f32 %v483, 1.5258789e-05
      %v485 = vsub.f32 %v484, %v320
      %v486 = vsub.f32 1.0, %v484
      %v487 = vmul.f32 %v484, %v486
      %v488 = vmul.f32 %v485, %v487
      %v489 = vmul.f32 %v484, 2.0
      %v490 = vsub.f32 %v489, 1.0
      %v491 = vmul.f32 %v323, %v490
      %v492 = vadd.f32 %v488, %v491
      %vm493 = vcmp.lt.f32.partialorder %v492, 0.0
      %v494 = vsel %vm493, %v484, %v483
      %v495 = vadd.f32 %v494, 7.6293945e-06
      %v496 = vsub.f32 %v495, %v320
      %v497 = vsub.f32 1.0, %v495
      %v498 = vmul.f32 %v495, %v497
      %v499 = vmul.f32 %v496, %v498
      %v500 = vmul.f32 %v495, 2.0
      %v501 = vsub.f32 %v500, 1.0
      %v502 = vmul.f32 %v323, %v501
      %v503 = vadd.f32 %v499, %v502
      %vm504 = vcmp.lt.f32.partialorder %v503, 0.0
      %v505 = vsel %vm504, %v495, %v494
      %v506 = vadd.f32 %v505, 3.8146973e-06
      %v507 = vsub.f32 %v506, %v320
      %v508 = vsub.f32 1.0, %v506
      %v509 = vmul.f32 %v506, %v508
      %v510 = vmul.f32 %v507, %v509
      %v511 = vmul.f32 %v506, 2.0
      %v512 = vsub.f32 %v511, 1.0
      %v513 = vmul.f32 %v323, %v512
      %v514 = vadd.f32 %v510, %v513
      %vm515 = vcmp.lt.f32.partialorder %v514, 0.0
      %v516 = vsel %vm515, %v506, %v505
      %v517 = vadd.f32 %v516, 1.9073486e-06
      %v518 = vsub.f32 %v517, %v320
      %v519 = vsub.f32 1.0, %v517
      %v520 = vmul.f32 %v517, %v519
      %v521 = vmul.f32 %v518, %v520
      %v522 = vmul.f32 %v517, 2.0
      %v523 = vsub.f32 %v522, 1.0
      %v524 = vmul.f32 %v323, %v523
      %v525 = vadd.f32 %v521, %v524
      %vm526 = vcmp.lt.f32.partialorder %v525, 0.0
      %v527 = vsel %vm526, %v517, %v516
      %v528 = vadd.f32 %v527, 9.536743e-07
      %v529 = vsub.f32 %v528, %v320
      %v530 = vsub.f32 1.0, %v528
      %v531 = vmul.f32 %v528, %v530
      %v532 = vmul.f32 %v529, %v531
      %v533 = vmul.f32 %v528, 2.0
      %v534 = vsub.f32 %v533, 1.0
      %v535 = vmul.f32 %v323, %v534
      %v536 = vadd.f32 %v532, %v535
      %vm537 = vcmp.lt.f32.partialorder %v536, 0.0
      %v538 = vsel %vm537, %v528, %v527
      %v539 = vadd.f32 %v538, 4.7683716e-07
      %v540 = vsub.f32 %v539, %v320
      %v541 = vsub.f32 1.0, %v539
      %v542 = vmul.f32 %v539, %v541
      %v543 = vmul.f32 %v540, %v542
      %v544 = vmul.f32 %v539, 2.0
      %v545 = vsub.f32 %v544, 1.0
      %v546 = vmul.f32 %v323, %v545
      %v547 = vadd.f32 %v543, %v546
      %vm548 = vcmp.lt.f32.partialorder %v547, 0.0
      %v549 = vsel %vm548, %v539, %v538
      %v550 = vadd.f32 %v549, 2.3841858e-07
      %v551 = vsub.f32 %v550, %v320
      %v552 = vsub.f32 1.0, %v550
      %v553 = vmul.f32 %v550, %v552
      %v554 = vmul.f32 %v551, %v553
      %v555 = vmul.f32 %v550, 2.0
      %v556 = vsub.f32 %v555, 1.0
      %v557 = vmul.f32 %v323, %v556
      %v558 = vadd.f32 %v554, %v557
      %vm559 = vcmp.lt.f32.partialorder %v558, 0.0
      %v560 = vsel %vm559, %v550, %v549
      %v561 = vadd.f32 %v560, 1.1920929e-07
      %v562 = vsub.f32 %v561, %v320
      %v563 = vsub.f32 1.0, %v561
      %v564 = vmul.f32 %v561, %v563
      %v565 = vmul.f32 %v562, %v564
      %v566 = vmul.f32 %v561, 2.0
      %v567 = vsub.f32 %v566, 1.0
      %v568 = vmul.f32 %v323, %v567
      %v569 = vadd.f32 %v565, %v568
      %vm570 = vcmp.lt.f32.partialorder %v569, 0.0
      %v571 = vsel %vm570, %v561, %v560
      %v572 = vadd.f32 %v571, 5.9604645e-08
      %v573 = vsub.f32 %v572, %v320
      %v574 = vsub.f32 1.0, %v572
      %v575 = vmul.f32 %v572, %v574
      %v576 = vmul.f32 %v573, %v575
      %v577 = vmul.f32 %v572, 2.0
      %v578 = vsub.f32 %v577, 1.0
      %v579 = vmul.f32 %v323, %v578
      %v580 = vadd.f32 %v576, %v579
      %vm581 = vcmp.lt.f32.partialorder %v580, 0.0
      %v582 = vsel %vm581, %v572, %v571
      %v583 = vadd.f32 %v582, 2.9802322e-08
      %v585 = vsel %vm64, %v583, 0
      %587 = vmatpush.msra.mxu0 0.0
      %588 = vmatpush.msra.mxu0 0.0
      %589 = vmatpush.msra.mxu0 0.0
      %590 = vmatpush.msra.mxu0 0.0
      %591 = vmatpush.msra.mxu0 0.0
      %592 = vmatpush.msra.mxu0 0.0
      %593 = vmatpush.msra.mxu0 0.0
      %594 = vmatpush.msra.mxu0 0.0
      %595 = vmatpush.msra.mxu0 0.0
      %596 = vmatpush.msra.mxu0 0.0
      %597 = vmatpush.msra.mxu0 0.0
      %598 = vmatpush.msra.mxu0 0.0
      %599 = vmatpush.msra.mxu0 %v56
      %600 = vmatpush.msra.mxu0 %v55
      %601 = vmatpush.msra.mxu0 %v54
      %602 = vmatpush.msra.mxu0 %v53
      %603 = vmatmul.f32.gmra.mxu0 %v585
      %v604 = vpop.f32.mrf.mxu0
      %v605 = vadd.f32 0.0, %v604
      %606 = vdwg.mxu0
    $region50: #{my_model_forward.1} parent=1 // loop_footer
      %s124 = sadd.s32 1, %s120
    $region51: #{my_model_forward.1} parent=1 // loop_footer_branch
      %119 = sbr.rel target = $region47
    $region52: #{my_model_forward.1} parent=1 // loop_exit
      _
    %607 = vst.msk [vmem:[%s10] sm:$0xff] %vm64, %v125
    // Predicated region
    $region53: #{my_model_forward.1} parent=1 // pred_check
      _
    $region54: #{my_model_forward.1} parent=1 // pred_check_branch
      %609 = sbr.rel (0) target = $region56
    $region55: #{my_model_forward.1} parent=1 // pred_region
      _
    $region56: #{my_model_forward.1} parent=1 // pred_fallthru
      _
    // Predicated region
    $region57: #{my_model_forward.1} parent=1 // pred_check
      _
    $region58: #{my_model_forward.1} parent=1 // pred_check_branch
      %611 = sbr.rel (0) target = $region60
    $region59: #{my_model_forward.1} parent=1 // pred_region
      _
    $region60: #{my_model_forward.1} parent=1 // pred_fallthru
      _
    %612 = vsyncpa [#allocation3], 1

</llo_original>
